<compile_context>
chip_gen: v7x
topology: tpu7x:2x2x1
jax: 0.10.0
libtpu: 0.0.40
codegen_flags: <defaults>
</compile_context>

<pallas_src>
import functools

import jax
import jax.numpy as jnp
from jax.experimental import pallas as pl
from jax.experimental.pallas import tpu as pltpu


def _bilstm_kernel(lens_ref, pre_f_ref, pre_b_ref, whh_ref, out_ref, h_ref, c_ref,
                   *, tc, t_pad, hidden):
    """Grid = (time_chunk,).  Each grid step runs `tc` fused recurrent steps:
    forward direction at time t and backward direction at original time
    Tp-1-t share one block-diagonal [Bp,2H]x[2H,8H] dot and a single
    full-width tanh (i/f/o weight columns are pre-scaled by 0.5 in the
    wrapper so sigmoid(z) == 0.5 + 0.5*tanh(gates)).  LSTM state [h_f|h_b],
    [c_f|c_b] lives in VMEM scratch and is carried across the chunk axis."""
    chunk = pl.program_id(0)
    H = hidden

    @pl.when(chunk == 0)
    def _():                        # fresh state at the start of the sequence
        h_ref[...] = jnp.zeros_like(h_ref)
        c_ref[...] = jnp.zeros_like(c_ref)

    whh = whh_ref[...]              # [2H, 8H] block-diagonal (fwd rows | bwd rows)
    lens = lens_ref[...]            # [Bp, 1] int32 sequence lengths (0 for pad rows)
    col_is_fwd = jax.lax.broadcasted_iota(jnp.int32, (1, 2 * H), 1) < H   # hoisted
    t_base = chunk * tc

    # tc is a small static python int -> fully unrolled at trace time.
    for i in range(tc):
        t_f = t_base + i                    # forward time index
        t_b = (t_pad - 1) - t_f             # backward direction's original time index

        # Single fused recurrent dot for both directions (K=2H, N=8H).
        rec = jnp.dot(h_ref[...], whh, preferred_element_type=jnp.float32)   # [Bp, 8H]
        # pre_b block is indexed at chunk nc-1-c, row tc-1-i -> original time Tp-1-t_f.
        pre = jnp.concatenate([pre_f_ref[i], pre_b_ref[tc - 1 - i]], axis=-1)
        th = jnp.tanh(pre + rec)            # ONE EUP push for all 8 gates of both dirs

        c_halves, o_halves = [], []
        for d in range(2):                  # gate column order per direction: [i, f, o, g]
            a = th[:, d * 4 * H:(d + 1) * 4 * H]
            sig = 0.5 + 0.5 * a[:, :3 * H]                      # sigmoid(i), sigmoid(f), sigmoid(o)
            c_half = (sig[:, H:2 * H] * c_ref[:, d * H:(d + 1) * H]
                      + sig[:, :H] * a[:, 3 * H:])              # f*c + i*g
            c_halves.append(c_half)
            o_halves.append(sig[:, 2 * H:3 * H])
        c_new = jnp.concatenate(c_halves, axis=-1)              # [Bp, 2H] = [c_f | c_b]
        h_new = jnp.concatenate(o_halves, axis=-1) * jnp.tanh(c_new)

        # Validity: forward columns need t_f < len, backward columns t_b < len.
        thresh = jnp.where(col_is_fwd, t_f, t_b)                # [1, 2H]
        keep = lens > thresh                                    # [Bp, 2H]
        # State only advances on valid positions: matches packed-seq semantics
        # (backward dir starts at t = len-1 with zero state).
        c_ref[...] = jnp.where(keep, c_new, c_ref[...])
        h_ref[...] = jnp.where(keep, h_new, h_ref[...])
        # pad_packed_sequence zero-fills padded positions.  Static 2H-wide strip
        # write into the lane-dense [Bp, TC*2H] out block.
        out_ref[0, :, pl.ds(i * 2 * H, 2 * H)] = jnp.where(keep, h_new, 0.0)


@functools.partial(jax.jit, static_argnames=("time_chunk",))
def encoder_forward(token_embeds, attention_mask, params, *, time_chunk=32):
    B, T, F = token_embeds.shape
    H = params["whh_f"].shape[0]

    Bp = -(-B // 8) * 8                      # pad batch to sublane multiple
    TC = max(1, min(time_chunk, T))
    nc = -(-T // TC)
    Tp = nc * TC                             # pad time to a multiple of the chunk

    lens = jnp.sum(attention_mask.astype(jnp.int32), axis=1)       # [B]
    lens_p = jnp.pad(lens, (0, Bp - B))[:, None]                   # [Bp, 1], pad rows -> 0

    x = jnp.pad(token_embeds.astype(jnp.float32),
                ((0, Bp - B), (0, Tp - T), (0, 0)))                # [Bp, Tp, F]
    x_tm = jnp.transpose(x, (1, 0, 2))                             # [Tp, Bp, F]

    def reorder(w):
        # PyTorch gate order [i, f, g, o] -> kernel order [i, f, o, g]; the
        # i/f/o columns are pre-scaled by 0.5 (exact, power of two) so that
        # sigmoid(z) = 0.5 + 0.5*tanh(scaled gate) with a single tanh.
        i_, f_, g_, o_ = jnp.split(w, 4, axis=-1)
        return jnp.concatenate([0.5 * i_, 0.5 * f_, 0.5 * o_, g_], axis=-1)

    wih_f = reorder(params["wih_f"]); b_f = reorder(params["b_f"])
    wih_b = reorder(params["wih_b"]); b_b = reorder(params["b_b"])
    whh_f = reorder(params["whh_f"]); whh_b = reorder(params["whh_b"])

    # Hoisted input projections: one large GEMM per direction, off the serial
    # path.  No stack / time-reversal pass: the backward reversal is folded
    # into the pre_b index_map inside the kernel.
    pre_f = jnp.einsum("tbf,fg->tbg", x_tm, wih_f) + b_f           # [Tp, Bp, 4H]
    pre_b = jnp.einsum("tbf,fg->tbg", x_tm, wih_b) + b_b           # [Tp, Bp, 4H]

    zeros = jnp.zeros((H, 4 * H), jnp.float32)
    whh = jnp.concatenate(
        [jnp.concatenate([whh_f, zeros], axis=1),
         jnp.concatenate([zeros, whh_b], axis=1)], axis=0)         # [2H, 8H] block-diag

    out = pl.pallas_call(
        functools.partial(_bilstm_kernel, tc=TC, t_pad=Tp, hidden=H),
        out_shape=jax.ShapeDtypeStruct((nc, Bp, TC * 2 * H), jnp.float32),
        grid=(nc,),
        in_specs=[
            pl.BlockSpec((Bp, 1), lambda c: (0, 0)),                       # lengths (resident)
            pl.BlockSpec((TC, Bp, 4 * H), lambda c: (c, 0, 0)),            # fwd pre-activations
            pl.BlockSpec((TC, Bp, 4 * H), lambda c: (nc - 1 - c, 0, 0)),   # bwd pre-acts, reversed chunks
            pl.BlockSpec((2 * H, 8 * H), lambda c: (0, 0)),                # fused W_hh (resident)
        ],
        out_specs=pl.BlockSpec((1, Bp, TC * 2 * H), lambda c: (c, 0, 0)),  # lane-dense (last dim >= 128)
        scratch_shapes=[pltpu.VMEM((Bp, 2 * H), jnp.float32),   # h state [h_f | h_b]
                        pltpu.VMEM((Bp, 2 * H), jnp.float32)],  # c state [c_f | c_b]
        compiler_params=pltpu.CompilerParams(
            dimension_semantics=("arbitrary",),                 # sequential state carry
            vmem_limit_bytes=32 * 1024 * 1024),
    )(lens_p, pre_f, pre_b, whh)

    # [nc, Bp, TC*2H] -> [Bp, Tp, 2, H]; backward half is in kernel-time order,
    # flip it along time (layout plumbing fused by XLA with the transpose).
    out = out.reshape(nc, Bp, TC, 2, H)
    out = jnp.transpose(out, (1, 0, 2, 3, 4)).reshape(Bp, Tp, 2, H)
    fwd = out[:, :, 0, :]
    bwd = out[:, ::-1, 1, :]
    output = jnp.concatenate([fwd, bwd], axis=-1)[:B, :T]
    return output, lens


def _make_params(key, in_feat):
    """Deterministic init matching nn.LSTM parameter shapes:
    weight_ih [4H, F], weight_hh [4H, H], bias_ih/bias_hh [4H] (both directions).
    Stored pre-transposed ([F,4H]/[H,4H]) with biases summed."""
    H = in_feat
    k = jax.random.split(key, 8)
    bound = 1.0 / jnp.sqrt(H)
    u = lambda kk, shape: jax.random.uniform(kk, shape, jnp.float32, -bound, bound)
    wih_f = u(k[0], (4 * H, in_feat))
    whh_f = u(k[1], (4 * H, H))
    b_f = u(k[2], (4 * H,)) + u(k[3], (4 * H,))
    wih_b = u(k[4], (4 * H, in_feat))
    whh_b = u(k[5], (4 * H, H))
    b_b = u(k[6], (4 * H,)) + u(k[7], (4 * H,))
    return {
        "wih_f": wih_f.T, "whh_f": whh_f.T, "b_f": b_f[None, :],
        "wih_b": wih_b.T, "whh_b": whh_b.T, "b_b": b_b[None, :],
    }


def _reference_forward(token_embeds, attention_mask, params):
    """Pure-JAX reference (same math, lax.scan) for correctness checking."""
    B, T, F = token_embeds.shape
    H = params["whh_f"].shape[0]
    x = token_embeds.astype(jnp.float32)
    m = attention_mask.astype(jnp.float32)

    def run(x_seq, m_seq, wih, whh, b):
        def step(carry, inp):
            h, c = carry
            xt, mt = inp                          # [B,F], [B,1]
            g = xt @ wih + h @ whh + b
            i = jax.nn.sigmoid(g[:, 0 * H:1 * H])
            f = jax.nn.sigmoid(g[:, 1 * H:2 * H])
            gg = jnp.tanh(g[:, 2 * H:3 * H])
            o = jax.nn.sigmoid(g[:, 3 * H:4 * H])
            c_new = f * c + i * gg
            h_new = o * jnp.tanh(c_new)
            keep = mt > 0.0
            c = jnp.where(keep, c_new, c)
            h = jnp.where(keep, h_new, h)
            return (h, c), jnp.where(keep, h_new, 0.0)
        init = (jnp.zeros((B, H), jnp.float32), jnp.zeros((B, H), jnp.float32))
        _, ys = jax.lax.scan(step, init, (x_seq, m_seq))
        return ys                                  # [T, B, H]

    x_tm = jnp.transpose(x, (1, 0, 2))
    m_tm = jnp.transpose(m, (1, 0))[..., None]
    of = run(x_tm, m_tm, params["wih_f"], params["whh_f"], params["b_f"])
    ob = run(x_tm[::-1], m_tm[::-1], params["wih_b"], params["whh_b"], params["b_b"])[::-1]
    out = jnp.transpose(jnp.concatenate([of, ob], axis=-1), (1, 0, 2))
    return out, jnp.sum(attention_mask.astype(jnp.int32), axis=1)


if __name__ == "__main__":
    # Small shapes consistent with the module: batch=2, seq=8, in_feat=32.
    B, T, F = 2, 8, 32
    key = jax.random.PRNGKey(0)
    k_x, k_p = jax.random.split(key)

    token_embeds = jax.random.normal(k_x, (B, T, F), jnp.float32)
    lengths = jnp.array([8, 5], dtype=jnp.int32)
    attention_mask = (jnp.arange(T)[None, :] < lengths[:, None]).astype(jnp.float32)

    params = _make_params(k_p, F)

    out, lens = encoder_forward(token_embeds, attention_mask, params)
    out = jax.block_until_ready(out)
    lens = jax.block_until_ready(lens)

    ref_out, ref_lens = _reference_forward(token_embeds, attention_mask, params)
    assert out.shape == (B, T, 2 * F) and lens.shape == (B,)
    assert jnp.allclose(out, ref_out, atol=1e-5), "mismatch vs pure-JAX reference"
    assert jnp.array_equal(lens, ref_lens)

    # TODO(synk): dropout_prob is accepted by Encoder.__init__ but never used in
    # its forward, so no dropout is implemented here (matches reference exactly).
    print("KERNEL_OK")
</pallas_src>

<mosaic_0001>
module attributes {stable_mosaic.version = 11 : i64} {
  func.func @_bilstm_kernel(%arg0: i32, %arg1: memref<8x1xi32, #tpu.memory_space<vmem>>, %arg2: memref<8x8x128xf32, #tpu.memory_space<vmem>>, %arg3: memref<8x8x128xf32, #tpu.memory_space<vmem>>, %arg4: memref<64x256xf32, #tpu.memory_space<vmem>>, %arg5: memref<1x8x512xf32, #tpu.memory_space<vmem>>, %arg6: memref<8x64xf32, #tpu.memory_space<vmem>>, %arg7: memref<8x64xf32, #tpu.memory_space<vmem>>) attributes {dimension_semantics = [#tpu.dimension_semantics<arbitrary>], iteration_bounds = array<i64: 1>, scalar_prefetch = 0 : i64, scratch_operands = 2 : i64, tpu.core_type = #tpu.core_type<tc>, window_params = [{pipeline_mode = #tpu.pipeline_mode<synchronous>, transform_indices = @transform_0, window_bounds = array<i64: 8, 1>}, {transform_indices = @transform_1, window_bounds = array<i64: 8, 8, 128>}, {transform_indices = @transform_2, window_bounds = array<i64: 8, 8, 128>}, {pipeline_mode = #tpu.pipeline_mode<synchronous>, transform_indices = @transform_3, window_bounds = array<i64: 64, 256>}, {transform_indices = @transform_4, window_bounds = array<i64: 1, 8, 512>}]} {
    %c0_i32 = arith.constant 0 : i32
    %0 = arith.cmpi eq, %arg0, %c0_i32 : i32
    %1 = arith.extui %0 : i1 to i32
    %c0_i32_0 = arith.constant 0 : i32
    %2 = arith.cmpi ne, %1, %c0_i32_0 : i32
    scf.if %2 {
      %cst_229 = arith.constant 0.000000e+00 : f32
      %489 = vector.broadcast %cst_229 : f32 to vector<8x64xf32>
      %c0_230 = arith.constant 0 : index
      %c0_231 = arith.constant 0 : index
      %490 = vector.load %arg6[%c0_230, %c0_231] : memref<8x64xf32, #tpu.memory_space<vmem>>, vector<8x64xf32>
      tpu.vector_store %arg6[%c0_230, %c0_231], %489 {strides = array<i32>} : memref<8x64xf32, #tpu.memory_space<vmem>>, vector<8x64xf32>,
      %cst_232 = arith.constant 0.000000e+00 : f32
      %491 = vector.broadcast %cst_232 : f32 to vector<8x64xf32>
      %c0_233 = arith.constant 0 : index
      %c0_234 = arith.constant 0 : index
      %492 = vector.load %arg7[%c0_233, %c0_234] : memref<8x64xf32, #tpu.memory_space<vmem>>, vector<8x64xf32>
      tpu.vector_store %arg7[%c0_233, %c0_234], %491 {strides = array<i32>} : memref<8x64xf32, #tpu.memory_space<vmem>>, vector<8x64xf32>,
    } else {
    }
    %c0 = arith.constant 0 : index
    %c0_1 = arith.constant 0 : index
    %3 = vector.load %arg4[%c0, %c0_1] : memref<64x256xf32, #tpu.memory_space<vmem>>, vector<64x256xf32>
    %c0_2 = arith.constant 0 : index
    %c0_3 = arith.constant 0 : index
    %4 = vector.load %arg1[%c0_2, %c0_3] : memref<8x1xi32, #tpu.memory_space<vmem>>, vector<8x1xi32>
    %5 = tpu.iota {dimensions = array<i32: 1>} : vector<1x64xi32>
    %c32_i32 = arith.constant 32 : i32
    %6 = vector.broadcast %c32_i32 : i32 to vector<1x64xi32>
    %7 = arith.cmpi slt, %5, %6 : vector<1x64xi32>
    %c8_i32 = arith.constant 8 : i32
    %8 = arith.muli %arg0, %c8_i32 : i32
    %c0_i32_4 = arith.constant 0 : i32
    %9 = arith.addi %8, %c0_i32_4 : i32
    %c7_i32 = arith.constant 7 : i32
    %10 = arith.subi %c7_i32, %9 : i32
    %c0_5 = arith.constant 0 : index
    %c0_6 = arith.constant 0 : index
    %11 = vector.load %arg6[%c0_5, %c0_6] : memref<8x64xf32, #tpu.memory_space<vmem>>, vector<8x64xf32>
    %cst = arith.constant dense<0.000000e+00> : vector<8x256xf32>
    %12 = tpu.matmul %11, %3, %cst {dimension_numbers = #tpu.dot_dimension_numbers<[1], [0], [0], [1], [0, 0, 1, 1], [], []>} : vector<8x64xf32>, vector<64x256xf32>, vector<8x256xf32> -> vector<8x256xf32>
    %c0_7 = arith.constant 0 : index
    %c0_8 = arith.constant 0 : index
    %c0_9 = arith.constant 0 : index
    %13 = vector.load %arg2[%c0_7, %c0_8, %c0_9] : memref<8x8x128xf32, #tpu.memory_space<vmem>>, vector<1x8x128xf32>
    %14 = vector.shape_cast %13 : vector<1x8x128xf32> to vector<8x128xf32>
    %c7 = arith.constant 7 : index
    %c0_10 = arith.constant 0 : index
    %c0_11 = arith.constant 0 : index
    %15 = vector.load %arg3[%c7, %c0_10, %c0_11] : memref<8x8x128xf32, #tpu.memory_space<vmem>>, vector<1x8x128xf32>
    %16 = vector.shape_cast %15 : vector<1x8x128xf32> to vector<8x128xf32>
    %17 = tpu.concatenate %14, %16 in 1 : vector<8x128xf32>, vector<8x128xf32> -> vector<8x256xf32>
    %18 = arith.addf %17, %12 : vector<8x256xf32>
    %19 = math.tanh %18 : vector<8x256xf32>
    %20 = vector.extract_strided_slice %19 {offsets = [0, 0], sizes = [8, 128], strides = [1, 1]} : vector<8x256xf32> to vector<8x128xf32>
    %21 = vector.extract_strided_slice %20 {offsets = [0, 0], sizes = [8, 96], strides = [1, 1]} : vector<8x128xf32> to vector<8x96xf32>
    %cst_12 = arith.constant 5.000000e-01 : f32
    %22 = vector.broadcast %cst_12 : f32 to vector<8x96xf32>
    %23 = arith.mulf %22, %21 : vector<8x96xf32>
    %cst_13 = arith.constant 5.000000e-01 : f32
    %24 = vector.broadcast %cst_13 : f32 to vector<8x96xf32>
    %25 = arith.addf %24, %23 : vector<8x96xf32>
    %26 = vector.extract_strided_slice %25 {offsets = [0, 32], sizes = [8, 32], strides = [1, 1]} : vector<8x96xf32> to vector<8x32xf32>
    %c0_14 = arith.constant 0 : index
    %c0_15 = arith.constant 0 : index
    %27 = vector.load %arg7[%c0_14, %c0_15] : memref<8x64xf32, #tpu.memory_space<vmem>>, vector<8x32xf32>
    %28 = arith.mulf %26, %27 : vector<8x32xf32>
    %29 = vector.extract_strided_slice %25 {offsets = [0, 0], sizes = [8, 32], strides = [1, 1]} : vector<8x96xf32> to vector<8x32xf32>
    %30 = vector.extract_strided_slice %20 {offsets = [0, 96], sizes = [8, 32], strides = [1, 1]} : vector<8x128xf32> to vector<8x32xf32>
    %31 = arith.mulf %29, %30 : vector<8x32xf32>
    %32 = arith.addf %28, %31 : vector<8x32xf32>
    %33 = vector.extract_strided_slice %25 {offsets = [0, 64], sizes = [8, 32], strides = [1, 1]} : vector<8x96xf32> to vector<8x32xf32>
    %34 = vector.extract_strided_slice %19 {offsets = [0, 128], sizes = [8, 128], strides = [1, 1]} : vector<8x256xf32> to vector<8x128xf32>
    %35 = vector.extract_strided_slice %34 {offsets = [0, 0], sizes = [8, 96], strides = [1, 1]} : vector<8x128xf32> to vector<8x96xf32>
    %cst_16 = arith.constant 5.000000e-01 : f32
    %36 = vector.broadcast %cst_16 : f32 to vector<8x96xf32>
    %37 = arith.mulf %36, %35 : vector<8x96xf32>
    %cst_17 = arith.constant 5.000000e-01 : f32
    %38 = vector.broadcast %cst_17 : f32 to vector<8x96xf32>
    %39 = arith.addf %38, %37 : vector<8x96xf32>
    %40 = vector.extract_strided_slice %39 {offsets = [0, 32], sizes = [8, 32], strides = [1, 1]} : vector<8x96xf32> to vector<8x32xf32>
    %c0_18 = arith.constant 0 : index
    %c32 = arith.constant 32 : index
    %41 = vector.load %arg7[%c0_18, %c32] : memref<8x64xf32, #tpu.memory_space<vmem>>, vector<8x32xf32>
    %42 = arith.mulf %40, %41 : vector<8x32xf32>
    %43 = vector.extract_strided_slice %39 {offsets = [0, 0], sizes = [8, 32], strides = [1, 1]} : vector<8x96xf32> to vector<8x32xf32>
    %44 = vector.extract_strided_slice %34 {offsets = [0, 96], sizes = [8, 32], strides = [1, 1]} : vector<8x128xf32> to vector<8x32xf32>
    %45 = arith.mulf %43, %44 : vector<8x32xf32>
    %46 = arith.addf %42, %45 : vector<8x32xf32>
    %47 = vector.extract_strided_slice %39 {offsets = [0, 64], sizes = [8, 32], strides = [1, 1]} : vector<8x96xf32> to vector<8x32xf32>
    %48 = tpu.concatenate %32, %46 in 1 : vector<8x32xf32>, vector<8x32xf32> -> vector<8x64xf32>
    %49 = tpu.concatenate %33, %47 in 1 : vector<8x32xf32>, vector<8x32xf32> -> vector<8x64xf32>
    %50 = math.tanh %48 : vector<8x64xf32>
    %51 = arith.mulf %49, %50 : vector<8x64xf32>
    %52 = vector.broadcast %9 : i32 to vector<1x64xi32>
    %53 = vector.broadcast %10 : i32 to vector<1x64xi32>
    %54 = arith.select %7, %52, %53 : vector<1x64xi1>, vector<1x64xi32>
    %55 = vector.broadcast %4 : vector<8x1xi32> to vector<8x64xi32>
    %56 = vector.broadcast %54 : vector<1x64xi32> to vector<8x64xi32>
    %57 = arith.cmpi sgt, %55, %56 : vector<8x64xi32>
    %c0_19 = arith.constant 0 : index
    %c0_20 = arith.constant 0 : index
    %58 = vector.load %arg7[%c0_19, %c0_20] : memref<8x64xf32, #tpu.memory_space<vmem>>, vector<8x64xf32>
    %59 = arith.select %57, %48, %58 : vector<8x64xi1>, vector<8x64xf32>
    %c0_21 = arith.constant 0 : index
    %c0_22 = arith.constant 0 : index
    %60 = vector.load %arg7[%c0_21, %c0_22] : memref<8x64xf32, #tpu.memory_space<vmem>>, vector<8x64xf32>
    tpu.vector_store %arg7[%c0_21, %c0_22], %59 {strides = array<i32>} : memref<8x64xf32, #tpu.memory_space<vmem>>, vector<8x64xf32>,
    %c0_23 = arith.constant 0 : index
    %c0_24 = arith.constant 0 : index
    %61 = vector.load %arg6[%c0_23, %c0_24] : memref<8x64xf32, #tpu.memory_space<vmem>>, vector<8x64xf32>
    %62 = arith.select %57, %51, %61 : vector<8x64xi1>, vector<8x64xf32>
    %c0_25 = arith.constant 0 : index
    %c0_26 = arith.constant 0 : index
    %63 = vector.load %arg6[%c0_25, %c0_26] : memref<8x64xf32, #tpu.memory_space<vmem>>, vector<8x64xf32>
    tpu.vector_store %arg6[%c0_25, %c0_26], %62 {strides = array<i32>} : memref<8x64xf32, #tpu.memory_space<vmem>>, vector<8x64xf32>,
    %cst_27 = arith.constant 0.000000e+00 : f32
    %64 = vector.broadcast %cst_27 : f32 to vector<8x64xf32>
    %65 = arith.select %57, %51, %64 : vector<8x64xi1>, vector<8x64xf32>
    %c0_28 = arith.constant 0 : index
    %c0_29 = arith.constant 0 : index
    %c0_30 = arith.constant 0 : index
    %66 = vector.load %arg5[%c0_28, %c0_29, %c0_30] : memref<1x8x512xf32, #tpu.memory_space<vmem>>, vector<1x8x64xf32>
    %67 = vector.shape_cast %66 : vector<1x8x64xf32> to vector<8x64xf32>
    %68 = vector.shape_cast %65 : vector<8x64xf32> to vector<1x8x64xf32>
    tpu.vector_store %arg5[%c0_28, %c0_29, %c0_30], %68 {strides = array<i32>} : memref<1x8x512xf32, #tpu.memory_space<vmem>>, vector<1x8x64xf32>,
    %c1_i32 = arith.constant 1 : i32
    %69 = arith.addi %8, %c1_i32 : i32
    %c7_i32_31 = arith.constant 7 : i32
    %70 = arith.subi %c7_i32_31, %69 : i32
    %c0_32 = arith.constant 0 : index
    %c0_33 = arith.constant 0 : index
    %71 = vector.load %arg6[%c0_32, %c0_33] : memref<8x64xf32, #tpu.memory_space<vmem>>, vector<8x64xf32>
    %cst_34 = arith.constant dense<0.000000e+00> : vector<8x256xf32>
    %72 = tpu.matmul %71, %3, %cst_34 {dimension_numbers = #tpu.dot_dimension_numbers<[1], [0], [0], [1], [0, 0, 1, 1], [], []>} : vector<8x64xf32>, vector<64x256xf32>, vector<8x256xf32> -> vector<8x256xf32>
    %c1 = arith.constant 1 : index
    %c0_35 = arith.constant 0 : index
    %c0_36 = arith.constant 0 : index
    %73 = vector.load %arg2[%c1, %c0_35, %c0_36] : memref<8x8x128xf32, #tpu.memory_space<vmem>>, vector<1x8x128xf32>
    %74 = vector.shape_cast %73 : vector<1x8x128xf32> to vector<8x128xf32>
    %c6 = arith.constant 6 : index
    %c0_37 = arith.constant 0 : index
    %c0_38 = arith.constant 0 : index
    %75 = vector.load %arg3[%c6, %c0_37, %c0_38] : memref<8x8x128xf32, #tpu.memory_space<vmem>>, vector<1x8x128xf32>
    %76 = vector.shape_cast %75 : vector<1x8x128xf32> to vector<8x128xf32>
    %77 = tpu.concatenate %74, %76 in 1 : vector<8x128xf32>, vector<8x128xf32> -> vector<8x256xf32>
    %78 = arith.addf %77, %72 : vector<8x256xf32>
    %79 = math.tanh %78 : vector<8x256xf32>
    %80 = vector.extract_strided_slice %79 {offsets = [0, 0], sizes = [8, 128], strides = [1, 1]} : vector<8x256xf32> to vector<8x128xf32>
    %81 = vector.extract_strided_slice %80 {offsets = [0, 0], sizes = [8, 96], strides = [1, 1]} : vector<8x128xf32> to vector<8x96xf32>
    %cst_39 = arith.constant 5.000000e-01 : f32
    %82 = vector.broadcast %cst_39 : f32 to vector<8x96xf32>
    %83 = arith.mulf %82, %81 : vector<8x96xf32>
    %cst_40 = arith.constant 5.000000e-01 : f32
    %84 = vector.broadcast %cst_40 : f32 to vector<8x96xf32>
    %85 = arith.addf %84, %83 : vector<8x96xf32>
    %86 = vector.extract_strided_slice %85 {offsets = [0, 32], sizes = [8, 32], strides = [1, 1]} : vector<8x96xf32> to vector<8x32xf32>
    %c0_41 = arith.constant 0 : index
    %c0_42 = arith.constant 0 : index
    %87 = vector.load %arg7[%c0_41, %c0_42] : memref<8x64xf32, #tpu.memory_space<vmem>>, vector<8x32xf32>
    %88 = arith.mulf %86, %87 : vector<8x32xf32>
    %89 = vector.extract_strided_slice %85 {offsets = [0, 0], sizes = [8, 32], strides = [1, 1]} : vector<8x96xf32> to vector<8x32xf32>
    %90 = vector.extract_strided_slice %80 {offsets = [0, 96], sizes = [8, 32], strides = [1, 1]} : vector<8x128xf32> to vector<8x32xf32>
    %91 = arith.mulf %89, %90 : vector<8x32xf32>
    %92 = arith.addf %88, %91 : vector<8x32xf32>
    %93 = vector.extract_strided_slice %85 {offsets = [0, 64], sizes = [8, 32], strides = [1, 1]} : vector<8x96xf32> to vector<8x32xf32>
    %94 = vector.extract_strided_slice %79 {offsets = [0, 128], sizes = [8, 128], strides = [1, 1]} : vector<8x256xf32> to vector<8x128xf32>
    %95 = vector.extract_strided_slice %94 {offsets = [0, 0], sizes = [8, 96], strides = [1, 1]} : vector<8x128xf32> to vector<8x96xf32>
    %cst_43 = arith.constant 5.000000e-01 : f32
    %96 = vector.broadcast %cst_43 : f32 to vector<8x96xf32>
    %97 = arith.mulf %96, %95 : vector<8x96xf32>
    %cst_44 = arith.constant 5.000000e-01 : f32
    %98 = vector.broadcast %cst_44 : f32 to vector<8x96xf32>
    %99 = arith.addf %98, %97 : vector<8x96xf32>
    %100 = vector.extract_strided_slice %99 {offsets = [0, 32], sizes = [8, 32], strides = [1, 1]} : vector<8x96xf32> to vector<8x32xf32>
    %c0_45 = arith.constant 0 : index
    %c32_46 = arith.constant 32 : index
    %101 = vector.load %arg7[%c0_45, %c32_46] : memref<8x64xf32, #tpu.memory_space<vmem>>, vector<8x32xf32>
    %102 = arith.mulf %100, %101 : vector<8x32xf32>
    %103 = vector.extract_strided_slice %99 {offsets = [0, 0], sizes = [8, 32], strides = [1, 1]} : vector<8x96xf32> to vector<8x32xf32>
    %104 = vector.extract_strided_slice %94 {offsets = [0, 96], sizes = [8, 32], strides = [1, 1]} : vector<8x128xf32> to vector<8x32xf32>
    %105 = arith.mulf %103, %104 : vector<8x32xf32>
    %106 = arith.addf %102, %105 : vector<8x32xf32>
    %107 = vector.extract_strided_slice %99 {offsets = [0, 64], sizes = [8, 32], strides = [1, 1]} : vector<8x96xf32> to vector<8x32xf32>
    %108 = tpu.concatenate %92, %106 in 1 : vector<8x32xf32>, vector<8x32xf32> -> vector<8x64xf32>
    %109 = tpu.concatenate %93, %107 in 1 : vector<8x32xf32>, vector<8x32xf32> -> vector<8x64xf32>
    %110 = math.tanh %108 : vector<8x64xf32>
    %111 = arith.mulf %109, %110 : vector<8x64xf32>
    %112 = vector.broadcast %69 : i32 to vector<1x64xi32>
    %113 = vector.broadcast %70 : i32 to vector<1x64xi32>
    %114 = arith.select %7, %112, %113 : vector<1x64xi1>, vector<1x64xi32>
    %115 = vector.broadcast %4 : vector<8x1xi32> to vector<8x64xi32>
    %116 = vector.broadcast %114 : vector<1x64xi32> to vector<8x64xi32>
    %117 = arith.cmpi sgt, %115, %116 : vector<8x64xi32>
    %c0_47 = arith.constant 0 : index
    %c0_48 = arith.constant 0 : index
    %118 = vector.load %arg7[%c0_47, %c0_48] : memref<8x64xf32, #tpu.memory_space<vmem>>, vector<8x64xf32>
    %119 = arith.select %117, %108, %118 : vector<8x64xi1>, vector<8x64xf32>
    %c0_49 = arith.constant 0 : index
    %c0_50 = arith.constant 0 : index
    %120 = vector.load %arg7[%c0_49, %c0_50] : memref<8x64xf32, #tpu.memory_space<vmem>>, vector<8x64xf32>
    tpu.vector_store %arg7[%c0_49, %c0_50], %119 {strides = array<i32>} : memref<8x64xf32, #tpu.memory_space<vmem>>, vector<8x64xf32>,
    %c0_51 = arith.constant 0 : index
    %c0_52 = arith.constant 0 : index
    %121 = vector.load %arg6[%c0_51, %c0_52] : memref<8x64xf32, #tpu.memory_space<vmem>>, vector<8x64xf32>
    %122 = arith.select %117, %111, %121 : vector<8x64xi1>, vector<8x64xf32>
    %c0_53 = arith.constant 0 : index
    %c0_54 = arith.constant 0 : index
    %123 = vector.load %arg6[%c0_53, %c0_54] : memref<8x64xf32, #tpu.memory_space<vmem>>, vector<8x64xf32>
    tpu.vector_store %arg6[%c0_53, %c0_54], %122 {strides = array<i32>} : memref<8x64xf32, #tpu.memory_space<vmem>>, vector<8x64xf32>,
    %cst_55 = arith.constant 0.000000e+00 : f32
    %124 = vector.broadcast %cst_55 : f32 to vector<8x64xf32>
    %125 = arith.select %117, %111, %124 : vector<8x64xi1>, vector<8x64xf32>
    %c0_56 = arith.constant 0 : index
    %c0_57 = arith.constant 0 : index
    %c64 = arith.constant 64 : index
    %126 = vector.load %arg5[%c0_56, %c0_57, %c64] : memref<1x8x512xf32, #tpu.memory_space<vmem>>, vector<1x8x64xf32>
    %127 = vector.shape_cast %126 : vector<1x8x64xf32> to vector<8x64xf32>
    %128 = vector.shape_cast %125 : vector<8x64xf32> to vector<1x8x64xf32>
    tpu.vector_store %arg5[%c0_56, %c0_57, %c64], %128 {strides = array<i32>} : memref<1x8x512xf32, #tpu.memory_space<vmem>>, vector<1x8x64xf32>,
    %c2_i32 = arith.constant 2 : i32
    %129 = arith.addi %8, %c2_i32 : i32
    %c7_i32_58 = arith.constant 7 : i32
    %130 = arith.subi %c7_i32_58, %129 : i32
    %c0_59 = arith.constant 0 : index
    %c0_60 = arith.constant 0 : index
    %131 = vector.load %arg6[%c0_59, %c0_60] : memref<8x64xf32, #tpu.memory_space<vmem>>, vector<8x64xf32>
    %cst_61 = arith.constant dense<0.000000e+00> : vector<8x256xf32>
    %132 = tpu.matmul %131, %3, %cst_61 {dimension_numbers = #tpu.dot_dimension_numbers<[1], [0], [0], [1], [0, 0, 1, 1], [], []>} : vector<8x64xf32>, vector<64x256xf32>, vector<8x256xf32> -> vector<8x256xf32>
    %c2 = arith.constant 2 : index
    %c0_62 = arith.constant 0 : index
    %c0_63 = arith.constant 0 : index
    %133 = vector.load %arg2[%c2, %c0_62, %c0_63] : memref<8x8x128xf32, #tpu.memory_space<vmem>>, vector<1x8x128xf32>
    %134 = vector.shape_cast %133 : vector<1x8x128xf32> to vector<8x128xf32>
    %c5 = arith.constant 5 : index
    %c0_64 = arith.constant 0 : index
    %c0_65 = arith.constant 0 : index
    %135 = vector.load %arg3[%c5, %c0_64, %c0_65] : memref<8x8x128xf32, #tpu.memory_space<vmem>>, vector<1x8x128xf32>
    %136 = vector.shape_cast %135 : vector<1x8x128xf32> to vector<8x128xf32>
    %137 = tpu.concatenate %134, %136 in 1 : vector<8x128xf32>, vector<8x128xf32> -> vector<8x256xf32>
    %138 = arith.addf %137, %132 : vector<8x256xf32>
    %139 = math.tanh %138 : vector<8x256xf32>
    %140 = vector.extract_strided_slice %139 {offsets = [0, 0], sizes = [8, 128], strides = [1, 1]} : vector<8x256xf32> to vector<8x128xf32>
    %141 = vector.extract_strided_slice %140 {offsets = [0, 0], sizes = [8, 96], strides = [1, 1]} : vector<8x128xf32> to vector<8x96xf32>
    %cst_66 = arith.constant 5.000000e-01 : f32
    %142 = vector.broadcast %cst_66 : f32 to vector<8x96xf32>
    %143 = arith.mulf %142, %141 : vector<8x96xf32>
    %cst_67 = arith.constant 5.000000e-01 : f32
    %144 = vector.broadcast %cst_67 : f32 to vector<8x96xf32>
    %145 = arith.addf %144, %143 : vector<8x96xf32>
    %146 = vector.extract_strided_slice %145 {offsets = [0, 32], sizes = [8, 32], strides = [1, 1]} : vector<8x96xf32> to vector<8x32xf32>
    %c0_68 = arith.constant 0 : index
    %c0_69 = arith.constant 0 : index
    %147 = vector.load %arg7[%c0_68, %c0_69] : memref<8x64xf32, #tpu.memory_space<vmem>>, vector<8x32xf32>
    %148 = arith.mulf %146, %147 : vector<8x32xf32>
    %149 = vector.extract_strided_slice %145 {offsets = [0, 0], sizes = [8, 32], strides = [1, 1]} : vector<8x96xf32> to vector<8x32xf32>
    %150 = vector.extract_strided_slice %140 {offsets = [0, 96], sizes = [8, 32], strides = [1, 1]} : vector<8x128xf32> to vector<8x32xf32>
    %151 = arith.mulf %149, %150 : vector<8x32xf32>
    %152 = arith.addf %148, %151 : vector<8x32xf32>
    %153 = vector.extract_strided_slice %145 {offsets = [0, 64], sizes = [8, 32], strides = [1, 1]} : vector<8x96xf32> to vector<8x32xf32>
    %154 = vector.extract_strided_slice %139 {offsets = [0, 128], sizes = [8, 128], strides = [1, 1]} : vector<8x256xf32> to vector<8x128xf32>
    %155 = vector.extract_strided_slice %154 {offsets = [0, 0], sizes = [8, 96], strides = [1, 1]} : vector<8x128xf32> to vector<8x96xf32>
    %cst_70 = arith.constant 5.000000e-01 : f32
    %156 = vector.broadcast %cst_70 : f32 to vector<8x96xf32>
    %157 = arith.mulf %156, %155 : vector<8x96xf32>
    %cst_71 = arith.constant 5.000000e-01 : f32
    %158 = vector.broadcast %cst_71 : f32 to vector<8x96xf32>
    %159 = arith.addf %158, %157 : vector<8x96xf32>
    %160 = vector.extract_strided_slice %159 {offsets = [0, 32], sizes = [8, 32], strides = [1, 1]} : vector<8x96xf32> to vector<8x32xf32>
    %c0_72 = arith.constant 0 : index
    %c32_73 = arith.constant 32 : index
    %161 = vector.load %arg7[%c0_72, %c32_73] : memref<8x64xf32, #tpu.memory_space<vmem>>, vector<8x32xf32>
    %162 = arith.mulf %160, %161 : vector<8x32xf32>
    %163 = vector.extract_strided_slice %159 {offsets = [0, 0], sizes = [8, 32], strides = [1, 1]} : vector<8x96xf32> to vector<8x32xf32>
    %164 = vector.extract_strided_slice %154 {offsets = [0, 96], sizes = [8, 32], strides = [1, 1]} : vector<8x128xf32> to vector<8x32xf32>
    %165 = arith.mulf %163, %164 : vector<8x32xf32>
    %166 = arith.addf %162, %165 : vector<8x32xf32>
    %167 = vector.extract_strided_slice %159 {offsets = [0, 64], sizes = [8, 32], strides = [1, 1]} : vector<8x96xf32> to vector<8x32xf32>
    %168 = tpu.concatenate %152, %166 in 1 : vector<8x32xf32>, vector<8x32xf32> -> vector<8x64xf32>
    %169 = tpu.concatenate %153, %167 in 1 : vector<8x32xf32>, vector<8x32xf32> -> vector<8x64xf32>
    %170 = math.tanh %168 : vector<8x64xf32>
    %171 = arith.mulf %169, %170 : vector<8x64xf32>
    %172 = vector.broadcast %129 : i32 to vector<1x64xi32>
    %173 = vector.broadcast %130 : i32 to vector<1x64xi32>
    %174 = arith.select %7, %172, %173 : vector<1x64xi1>, vector<1x64xi32>
    %175 = vector.broadcast %4 : vector<8x1xi32> to vector<8x64xi32>
    %176 = vector.broadcast %174 : vector<1x64xi32> to vector<8x64xi32>
    %177 = arith.cmpi sgt, %175, %176 : vector<8x64xi32>
    %c0_74 = arith.constant 0 : index
    %c0_75 = arith.constant 0 : index
    %178 = vector.load %arg7[%c0_74, %c0_75] : memref<8x64xf32, #tpu.memory_space<vmem>>, vector<8x64xf32>
    %179 = arith.select %177, %168, %178 : vector<8x64xi1>, vector<8x64xf32>
    %c0_76 = arith.constant 0 : index
    %c0_77 = arith.constant 0 : index
    %180 = vector.load %arg7[%c0_76, %c0_77] : memref<8x64xf32, #tpu.memory_space<vmem>>, vector<8x64xf32>
    tpu.vector_store %arg7[%c0_76, %c0_77], %179 {strides = array<i32>} : memref<8x64xf32, #tpu.memory_space<vmem>>, vector<8x64xf32>,
    %c0_78 = arith.constant 0 : index
    %c0_79 = arith.constant 0 : index
    %181 = vector.load %arg6[%c0_78, %c0_79] : memref<8x64xf32, #tpu.memory_space<vmem>>, vector<8x64xf32>
    %182 = arith.select %177, %171, %181 : vector<8x64xi1>, vector<8x64xf32>
    %c0_80 = arith.constant 0 : index
    %c0_81 = arith.constant 0 : index
    %183 = vector.load %arg6[%c0_80, %c0_81] : memref<8x64xf32, #tpu.memory_space<vmem>>, vector<8x64xf32>
    tpu.vector_store %arg6[%c0_80, %c0_81], %182 {strides = array<i32>} : memref<8x64xf32, #tpu.memory_space<vmem>>, vector<8x64xf32>,
    %cst_82 = arith.constant 0.000000e+00 : f32
    %184 = vector.broadcast %cst_82 : f32 to vector<8x64xf32>
    %185 = arith.select %177, %171, %184 : vector<8x64xi1>, vector<8x64xf32>
    %c0_83 = arith.constant 0 : index
    %c0_84 = arith.constant 0 : index
    %c128 = arith.constant 128 : index
    %186 = vector.load %arg5[%c0_83, %c0_84, %c128] : memref<1x8x512xf32, #tpu.memory_space<vmem>>, vector<1x8x64xf32>
    %187 = vector.shape_cast %186 : vector<1x8x64xf32> to vector<8x64xf32>
    %188 = vector.shape_cast %185 : vector<8x64xf32> to vector<1x8x64xf32>
    tpu.vector_store %arg5[%c0_83, %c0_84, %c128], %188 {strides = array<i32>} : memref<1x8x512xf32, #tpu.memory_space<vmem>>, vector<1x8x64xf32>,
    %c3_i32 = arith.constant 3 : i32
    %189 = arith.addi %8, %c3_i32 : i32
    %c7_i32_85 = arith.constant 7 : i32
    %190 = arith.subi %c7_i32_85, %189 : i32
    %c0_86 = arith.constant 0 : index
    %c0_87 = arith.constant 0 : index
    %191 = vector.load %arg6[%c0_86, %c0_87] : memref<8x64xf32, #tpu.memory_space<vmem>>, vector<8x64xf32>
    %cst_88 = arith.constant dense<0.000000e+00> : vector<8x256xf32>
    %192 = tpu.matmul %191, %3, %cst_88 {dimension_numbers = #tpu.dot_dimension_numbers<[1], [0], [0], [1], [0, 0, 1, 1], [], []>} : vector<8x64xf32>, vector<64x256xf32>, vector<8x256xf32> -> vector<8x256xf32>
    %c3 = arith.constant 3 : index
    %c0_89 = arith.constant 0 : index
    %c0_90 = arith.constant 0 : index
    %193 = vector.load %arg2[%c3, %c0_89, %c0_90] : memref<8x8x128xf32, #tpu.memory_space<vmem>>, vector<1x8x128xf32>
    %194 = vector.shape_cast %193 : vector<1x8x128xf32> to vector<8x128xf32>
    %c4 = arith.constant 4 : index
    %c0_91 = arith.constant 0 : index
    %c0_92 = arith.constant 0 : index
    %195 = vector.load %arg3[%c4, %c0_91, %c0_92] : memref<8x8x128xf32, #tpu.memory_space<vmem>>, vector<1x8x128xf32>
    %196 = vector.shape_cast %195 : vector<1x8x128xf32> to vector<8x128xf32>
    %197 = tpu.concatenate %194, %196 in 1 : vector<8x128xf32>, vector<8x128xf32> -> vector<8x256xf32>
    %198 = arith.addf %197, %192 : vector<8x256xf32>
    %199 = math.tanh %198 : vector<8x256xf32>
    %200 = vector.extract_strided_slice %199 {offsets = [0, 0], sizes = [8, 128], strides = [1, 1]} : vector<8x256xf32> to vector<8x128xf32>
    %201 = vector.extract_strided_slice %200 {offsets = [0, 0], sizes = [8, 96], strides = [1, 1]} : vector<8x128xf32> to vector<8x96xf32>
    %cst_93 = arith.constant 5.000000e-01 : f32
    %202 = vector.broadcast %cst_93 : f32 to vector<8x96xf32>
    %203 = arith.mulf %202, %201 : vector<8x96xf32>
    %cst_94 = arith.constant 5.000000e-01 : f32
    %204 = vector.broadcast %cst_94 : f32 to vector<8x96xf32>
    %205 = arith.addf %204, %203 : vector<8x96xf32>
    %206 = vector.extract_strided_slice %205 {offsets = [0, 32], sizes = [8, 32], strides = [1, 1]} : vector<8x96xf32> to vector<8x32xf32>
    %c0_95 = arith.constant 0 : index
    %c0_96 = arith.constant 0 : index
    %207 = vector.load %arg7[%c0_95, %c0_96] : memref<8x64xf32, #tpu.memory_space<vmem>>, vector<8x32xf32>
    %208 = arith.mulf %206, %207 : vector<8x32xf32>
    %209 = vector.extract_strided_slice %205 {offsets = [0, 0], sizes = [8, 32], strides = [1, 1]} : vector<8x96xf32> to vector<8x32xf32>
    %210 = vector.extract_strided_slice %200 {offsets = [0, 96], sizes = [8, 32], strides = [1, 1]} : vector<8x128xf32> to vector<8x32xf32>
    %211 = arith.mulf %209, %210 : vector<8x32xf32>
    %212 = arith.addf %208, %211 : vector<8x32xf32>
    %213 = vector.extract_strided_slice %205 {offsets = [0, 64], sizes = [8, 32], strides = [1, 1]} : vector<8x96xf32> to vector<8x32xf32>
    %214 = vector.extract_strided_slice %199 {offsets = [0, 128], sizes = [8, 128], strides = [1, 1]} : vector<8x256xf32> to vector<8x128xf32>
    %215 = vector.extract_strided_slice %214 {offsets = [0, 0], sizes = [8, 96], strides = [1, 1]} : vector<8x128xf32> to vector<8x96xf32>
    %cst_97 = arith.constant 5.000000e-01 : f32
    %216 = vector.broadcast %cst_97 : f32 to vector<8x96xf32>
    %217 = arith.mulf %216, %215 : vector<8x96xf32>
    %cst_98 = arith.constant 5.000000e-01 : f32
    %218 = vector.broadcast %cst_98 : f32 to vector<8x96xf32>
    %219 = arith.addf %218, %217 : vector<8x96xf32>
    %220 = vector.extract_strided_slice %219 {offsets = [0, 32], sizes = [8, 32], strides = [1, 1]} : vector<8x96xf32> to vector<8x32xf32>
    %c0_99 = arith.constant 0 : index
    %c32_100 = arith.constant 32 : index
    %221 = vector.load %arg7[%c0_99, %c32_100] : memref<8x64xf32, #tpu.memory_space<vmem>>, vector<8x32xf32>
    %222 = arith.mulf %220, %221 : vector<8x32xf32>
    %223 = vector.extract_strided_slice %219 {offsets = [0, 0], sizes = [8, 32], strides = [1, 1]} : vector<8x96xf32> to vector<8x32xf32>
    %224 = vector.extract_strided_slice %214 {offsets = [0, 96], sizes = [8, 32], strides = [1, 1]} : vector<8x128xf32> to vector<8x32xf32>
    %225 = arith.mulf %223, %224 : vector<8x32xf32>
    %226 = arith.addf %222, %225 : vector<8x32xf32>
    %227 = vector.extract_strided_slice %219 {offsets = [0, 64], sizes = [8, 32], strides = [1, 1]} : vector<8x96xf32> to vector<8x32xf32>
    %228 = tpu.concatenate %212, %226 in 1 : vector<8x32xf32>, vector<8x32xf32> -> vector<8x64xf32>
    %229 = tpu.concatenate %213, %227 in 1 : vector<8x32xf32>, vector<8x32xf32> -> vector<8x64xf32>
    %230 = math.tanh %228 : vector<8x64xf32>
    %231 = arith.mulf %229, %230 : vector<8x64xf32>
    %232 = vector.broadcast %189 : i32 to vector<1x64xi32>
    %233 = vector.broadcast %190 : i32 to vector<1x64xi32>
    %234 = arith.select %7, %232, %233 : vector<1x64xi1>, vector<1x64xi32>
    %235 = vector.broadcast %4 : vector<8x1xi32> to vector<8x64xi32>
    %236 = vector.broadcast %234 : vector<1x64xi32> to vector<8x64xi32>
    %237 = arith.cmpi sgt, %235, %236 : vector<8x64xi32>
    %c0_101 = arith.constant 0 : index
    %c0_102 = arith.constant 0 : index
    %238 = vector.load %arg7[%c0_101, %c0_102] : memref<8x64xf32, #tpu.memory_space<vmem>>, vector<8x64xf32>
    %239 = arith.select %237, %228, %238 : vector<8x64xi1>, vector<8x64xf32>
    %c0_103 = arith.constant 0 : index
    %c0_104 = arith.constant 0 : index
    %240 = vector.load %arg7[%c0_103, %c0_104] : memref<8x64xf32, #tpu.memory_space<vmem>>, vector<8x64xf32>
    tpu.vector_store %arg7[%c0_103, %c0_104], %239 {strides = array<i32>} : memref<8x64xf32, #tpu.memory_space<vmem>>, vector<8x64xf32>,
    %c0_105 = arith.constant 0 : index
    %c0_106 = arith.constant 0 : index
    %241 = vector.load %arg6[%c0_105, %c0_106] : memref<8x64xf32, #tpu.memory_space<vmem>>, vector<8x64xf32>
    %242 = arith.select %237, %231, %241 : vector<8x64xi1>, vector<8x64xf32>
    %c0_107 = arith.constant 0 : index
    %c0_108 = arith.constant 0 : index
    %243 = vector.load %arg6[%c0_107, %c0_108] : memref<8x64xf32, #tpu.memory_space<vmem>>, vector<8x64xf32>
    tpu.vector_store %arg6[%c0_107, %c0_108], %242 {strides = array<i32>} : memref<8x64xf32, #tpu.memory_space<vmem>>, vector<8x64xf32>,
    %cst_109 = arith.constant 0.000000e+00 : f32
    %244 = vector.broadcast %cst_109 : f32 to vector<8x64xf32>
    %245 = arith.select %237, %231, %244 : vector<8x64xi1>, vector<8x64xf32>
    %c0_110 = arith.constant 0 : index
    %c0_111 = arith.constant 0 : index
    %c192 = arith.constant 192 : index
    %246 = vector.load %arg5[%c0_110, %c0_111, %c192] : memref<1x8x512xf32, #tpu.memory_space<vmem>>, vector<1x8x64xf32>
    %247 = vector.shape_cast %246 : vector<1x8x64xf32> to vector<8x64xf32>
    %248 = vector.shape_cast %245 : vector<8x64xf32> to vector<1x8x64xf32>
    tpu.vector_store %arg5[%c0_110, %c0_111, %c192], %248 {strides = array<i32>} : memref<1x8x512xf32, #tpu.memory_space<vmem>>, vector<1x8x64xf32>,
    %c4_i32 = arith.constant 4 : i32
    %249 = arith.addi %8, %c4_i32 : i32
    %c7_i32_112 = arith.constant 7 : i32
    %250 = arith.subi %c7_i32_112, %249 : i32
    %c0_113 = arith.constant 0 : index
    %c0_114 = arith.constant 0 : index
    %251 = vector.load %arg6[%c0_113, %c0_114] : memref<8x64xf32, #tpu.memory_space<vmem>>, vector<8x64xf32>
    %cst_115 = arith.constant dense<0.000000e+00> : vector<8x256xf32>
    %252 = tpu.matmul %251, %3, %cst_115 {dimension_numbers = #tpu.dot_dimension_numbers<[1], [0], [0], [1], [0, 0, 1, 1], [], []>} : vector<8x64xf32>, vector<64x256xf32>, vector<8x256xf32> -> vector<8x256xf32>
    %c4_116 = arith.constant 4 : index
    %c0_117 = arith.constant 0 : index
    %c0_118 = arith.constant 0 : index
    %253 = vector.load %arg2[%c4_116, %c0_117, %c0_118] : memref<8x8x128xf32, #tpu.memory_space<vmem>>, vector<1x8x128xf32>
    %254 = vector.shape_cast %253 : vector<1x8x128xf32> to vector<8x128xf32>
    %c3_119 = arith.constant 3 : index
    %c0_120 = arith.constant 0 : index
    %c0_121 = arith.constant 0 : index
    %255 = vector.load %arg3[%c3_119, %c0_120, %c0_121] : memref<8x8x128xf32, #tpu.memory_space<vmem>>, vector<1x8x128xf32>
    %256 = vector.shape_cast %255 : vector<1x8x128xf32> to vector<8x128xf32>
    %257 = tpu.concatenate %254, %256 in 1 : vector<8x128xf32>, vector<8x128xf32> -> vector<8x256xf32>
    %258 = arith.addf %257, %252 : vector<8x256xf32>
    %259 = math.tanh %258 : vector<8x256xf32>
    %260 = vector.extract_strided_slice %259 {offsets = [0, 0], sizes = [8, 128], strides = [1, 1]} : vector<8x256xf32> to vector<8x128xf32>
    %261 = vector.extract_strided_slice %260 {offsets = [0, 0], sizes = [8, 96], strides = [1, 1]} : vector<8x128xf32> to vector<8x96xf32>
    %cst_122 = arith.constant 5.000000e-01 : f32
    %262 = vector.broadcast %cst_122 : f32 to vector<8x96xf32>
    %263 = arith.mulf %262, %261 : vector<8x96xf32>
    %cst_123 = arith.constant 5.000000e-01 : f32
    %264 = vector.broadcast %cst_123 : f32 to vector<8x96xf32>
    %265 = arith.addf %264, %263 : vector<8x96xf32>
    %266 = vector.extract_strided_slice %265 {offsets = [0, 32], sizes = [8, 32], strides = [1, 1]} : vector<8x96xf32> to vector<8x32xf32>
    %c0_124 = arith.constant 0 : index
    %c0_125 = arith.constant 0 : index
    %267 = vector.load %arg7[%c0_124, %c0_125] : memref<8x64xf32, #tpu.memory_space<vmem>>, vector<8x32xf32>
    %268 = arith.mulf %266, %267 : vector<8x32xf32>
    %269 = vector.extract_strided_slice %265 {offsets = [0, 0], sizes = [8, 32], strides = [1, 1]} : vector<8x96xf32> to vector<8x32xf32>
    %270 = vector.extract_strided_slice %260 {offsets = [0, 96], sizes = [8, 32], strides = [1, 1]} : vector<8x128xf32> to vector<8x32xf32>
    %271 = arith.mulf %269, %270 : vector<8x32xf32>
    %272 = arith.addf %268, %271 : vector<8x32xf32>
    %273 = vector.extract_strided_slice %265 {offsets = [0, 64], sizes = [8, 32], strides = [1, 1]} : vector<8x96xf32> to vector<8x32xf32>
    %274 = vector.extract_strided_slice %259 {offsets = [0, 128], sizes = [8, 128], strides = [1, 1]} : vector<8x256xf32> to vector<8x128xf32>
    %275 = vector.extract_strided_slice %274 {offsets = [0, 0], sizes = [8, 96], strides = [1, 1]} : vector<8x128xf32> to vector<8x96xf32>
    %cst_126 = arith.constant 5.000000e-01 : f32
    %276 = vector.broadcast %cst_126 : f32 to vector<8x96xf32>
    %277 = arith.mulf %276, %275 : vector<8x96xf32>
    %cst_127 = arith.constant 5.000000e-01 : f32
    %278 = vector.broadcast %cst_127 : f32 to vector<8x96xf32>
    %279 = arith.addf %278, %277 : vector<8x96xf32>
    %280 = vector.extract_strided_slice %279 {offsets = [0, 32], sizes = [8, 32], strides = [1, 1]} : vector<8x96xf32> to vector<8x32xf32>
    %c0_128 = arith.constant 0 : index
    %c32_129 = arith.constant 32 : index
    %281 = vector.load %arg7[%c0_128, %c32_129] : memref<8x64xf32, #tpu.memory_space<vmem>>, vector<8x32xf32>
    %282 = arith.mulf %280, %281 : vector<8x32xf32>
    %283 = vector.extract_strided_slice %279 {offsets = [0, 0], sizes = [8, 32], strides = [1, 1]} : vector<8x96xf32> to vector<8x32xf32>
    %284 = vector.extract_strided_slice %274 {offsets = [0, 96], sizes = [8, 32], strides = [1, 1]} : vector<8x128xf32> to vector<8x32xf32>
    %285 = arith.mulf %283, %284 : vector<8x32xf32>
    %286 = arith.addf %282, %285 : vector<8x32xf32>
    %287 = vector.extract_strided_slice %279 {offsets = [0, 64], sizes = [8, 32], strides = [1, 1]} : vector<8x96xf32> to vector<8x32xf32>
    %288 = tpu.concatenate %272, %286 in 1 : vector<8x32xf32>, vector<8x32xf32> -> vector<8x64xf32>
    %289 = tpu.concatenate %273, %287 in 1 : vector<8x32xf32>, vector<8x32xf32> -> vector<8x64xf32>
    %290 = math.tanh %288 : vector<8x64xf32>
    %291 = arith.mulf %289, %290 : vector<8x64xf32>
    %292 = vector.broadcast %249 : i32 to vector<1x64xi32>
    %293 = vector.broadcast %250 : i32 to vector<1x64xi32>
    %294 = arith.select %7, %292, %293 : vector<1x64xi1>, vector<1x64xi32>
    %295 = vector.broadcast %4 : vector<8x1xi32> to vector<8x64xi32>
    %296 = vector.broadcast %294 : vector<1x64xi32> to vector<8x64xi32>
    %297 = arith.cmpi sgt, %295, %296 : vector<8x64xi32>
    %c0_130 = arith.constant 0 : index
    %c0_131 = arith.constant 0 : index
    %298 = vector.load %arg7[%c0_130, %c0_131] : memref<8x64xf32, #tpu.memory_space<vmem>>, vector<8x64xf32>
    %299 = arith.select %297, %288, %298 : vector<8x64xi1>, vector<8x64xf32>
    %c0_132 = arith.constant 0 : index
    %c0_133 = arith.constant 0 : index
    %300 = vector.load %arg7[%c0_132, %c0_133] : memref<8x64xf32, #tpu.memory_space<vmem>>, vector<8x64xf32>
    tpu.vector_store %arg7[%c0_132, %c0_133], %299 {strides = array<i32>} : memref<8x64xf32, #tpu.memory_space<vmem>>, vector<8x64xf32>,
    %c0_134 = arith.constant 0 : index
    %c0_135 = arith.constant 0 : index
    %301 = vector.load %arg6[%c0_134, %c0_135] : memref<8x64xf32, #tpu.memory_space<vmem>>, vector<8x64xf32>
    %302 = arith.select %297, %291, %301 : vector<8x64xi1>, vector<8x64xf32>
    %c0_136 = arith.constant 0 : index
    %c0_137 = arith.constant 0 : index
    %303 = vector.load %arg6[%c0_136, %c0_137] : memref<8x64xf32, #tpu.memory_space<vmem>>, vector<8x64xf32>
    tpu.vector_store %arg6[%c0_136, %c0_137], %302 {strides = array<i32>} : memref<8x64xf32, #tpu.memory_space<vmem>>, vector<8x64xf32>,
    %cst_138 = arith.constant 0.000000e+00 : f32
    %304 = vector.broadcast %cst_138 : f32 to vector<8x64xf32>
    %305 = arith.select %297, %291, %304 : vector<8x64xi1>, vector<8x64xf32>
    %c0_139 = arith.constant 0 : index
    %c0_140 = arith.constant 0 : index
    %c256 = arith.constant 256 : index
    %306 = vector.load %arg5[%c0_139, %c0_140, %c256] : memref<1x8x512xf32, #tpu.memory_space<vmem>>, vector<1x8x64xf32>
    %307 = vector.shape_cast %306 : vector<1x8x64xf32> to vector<8x64xf32>
    %308 = vector.shape_cast %305 : vector<8x64xf32> to vector<1x8x64xf32>
    tpu.vector_store %arg5[%c0_139, %c0_140, %c256], %308 {strides = array<i32>} : memref<1x8x512xf32, #tpu.memory_space<vmem>>, vector<1x8x64xf32>,
    %c5_i32 = arith.constant 5 : i32
    %309 = arith.addi %8, %c5_i32 : i32
    %c7_i32_141 = arith.constant 7 : i32
    %310 = arith.subi %c7_i32_141, %309 : i32
    %c0_142 = arith.constant 0 : index
    %c0_143 = arith.constant 0 : index
    %311 = vector.load %arg6[%c0_142, %c0_143] : memref<8x64xf32, #tpu.memory_space<vmem>>, vector<8x64xf32>
    %cst_144 = arith.constant dense<0.000000e+00> : vector<8x256xf32>
    %312 = tpu.matmul %311, %3, %cst_144 {dimension_numbers = #tpu.dot_dimension_numbers<[1], [0], [0], [1], [0, 0, 1, 1], [], []>} : vector<8x64xf32>, vector<64x256xf32>, vector<8x256xf32> -> vector<8x256xf32>
    %c5_145 = arith.constant 5 : index
    %c0_146 = arith.constant 0 : index
    %c0_147 = arith.constant 0 : index
    %313 = vector.load %arg2[%c5_145, %c0_146, %c0_147] : memref<8x8x128xf32, #tpu.memory_space<vmem>>, vector<1x8x128xf32>
    %314 = vector.shape_cast %313 : vector<1x8x128xf32> to vector<8x128xf32>
    %c2_148 = arith.constant 2 : index
    %c0_149 = arith.constant 0 : index
    %c0_150 = arith.constant 0 : index
    %315 = vector.load %arg3[%c2_148, %c0_149, %c0_150] : memref<8x8x128xf32, #tpu.memory_space<vmem>>, vector<1x8x128xf32>
    %316 = vector.shape_cast %315 : vector<1x8x128xf32> to vector<8x128xf32>
    %317 = tpu.concatenate %314, %316 in 1 : vector<8x128xf32>, vector<8x128xf32> -> vector<8x256xf32>
    %318 = arith.addf %317, %312 : vector<8x256xf32>
    %319 = math.tanh %318 : vector<8x256xf32>
    %320 = vector.extract_strided_slice %319 {offsets = [0, 0], sizes = [8, 128], strides = [1, 1]} : vector<8x256xf32> to vector<8x128xf32>
    %321 = vector.extract_strided_slice %320 {offsets = [0, 0], sizes = [8, 96], strides = [1, 1]} : vector<8x128xf32> to vector<8x96xf32>
    %cst_151 = arith.constant 5.000000e-01 : f32
    %322 = vector.broadcast %cst_151 : f32 to vector<8x96xf32>
    %323 = arith.mulf %322, %321 : vector<8x96xf32>
    %cst_152 = arith.constant 5.000000e-01 : f32
    %324 = vector.broadcast %cst_152 : f32 to vector<8x96xf32>
    %325 = arith.addf %324, %323 : vector<8x96xf32>
    %326 = vector.extract_strided_slice %325 {offsets = [0, 32], sizes = [8, 32], strides = [1, 1]} : vector<8x96xf32> to vector<8x32xf32>
    %c0_153 = arith.constant 0 : index
    %c0_154 = arith.constant 0 : index
    %327 = vector.load %arg7[%c0_153, %c0_154] : memref<8x64xf32, #tpu.memory_space<vmem>>, vector<8x32xf32>
    %328 = arith.mulf %326, %327 : vector<8x32xf32>
    %329 = vector.extract_strided_slice %325 {offsets = [0, 0], sizes = [8, 32], strides = [1, 1]} : vector<8x96xf32> to vector<8x32xf32>
    %330 = vector.extract_strided_slice %320 {offsets = [0, 96], sizes = [8, 32], strides = [1, 1]} : vector<8x128xf32> to vector<8x32xf32>
    %331 = arith.mulf %329, %330 : vector<8x32xf32>
    %332 = arith.addf %328, %331 : vector<8x32xf32>
    %333 = vector.extract_strided_slice %325 {offsets = [0, 64], sizes = [8, 32], strides = [1, 1]} : vector<8x96xf32> to vector<8x32xf32>
    %334 = vector.extract_strided_slice %319 {offsets = [0, 128], sizes = [8, 128], strides = [1, 1]} : vector<8x256xf32> to vector<8x128xf32>
    %335 = vector.extract_strided_slice %334 {offsets = [0, 0], sizes = [8, 96], strides = [1, 1]} : vector<8x128xf32> to vector<8x96xf32>
    %cst_155 = arith.constant 5.000000e-01 : f32
    %336 = vector.broadcast %cst_155 : f32 to vector<8x96xf32>
    %337 = arith.mulf %336, %335 : vector<8x96xf32>
    %cst_156 = arith.constant 5.000000e-01 : f32
    %338 = vector.broadcast %cst_156 : f32 to vector<8x96xf32>
    %339 = arith.addf %338, %337 : vector<8x96xf32>
    %340 = vector.extract_strided_slice %339 {offsets = [0, 32], sizes = [8, 32], strides = [1, 1]} : vector<8x96xf32> to vector<8x32xf32>
    %c0_157 = arith.constant 0 : index
    %c32_158 = arith.constant 32 : index
    %341 = vector.load %arg7[%c0_157, %c32_158] : memref<8x64xf32, #tpu.memory_space<vmem>>, vector<8x32xf32>
    %342 = arith.mulf %340, %341 : vector<8x32xf32>
    %343 = vector.extract_strided_slice %339 {offsets = [0, 0], sizes = [8, 32], strides = [1, 1]} : vector<8x96xf32> to vector<8x32xf32>
    %344 = vector.extract_strided_slice %334 {offsets = [0, 96], sizes = [8, 32], strides = [1, 1]} : vector<8x128xf32> to vector<8x32xf32>
    %345 = arith.mulf %343, %344 : vector<8x32xf32>
    %346 = arith.addf %342, %345 : vector<8x32xf32>
    %347 = vector.extract_strided_slice %339 {offsets = [0, 64], sizes = [8, 32], strides = [1, 1]} : vector<8x96xf32> to vector<8x32xf32>
    %348 = tpu.concatenate %332, %346 in 1 : vector<8x32xf32>, vector<8x32xf32> -> vector<8x64xf32>
    %349 = tpu.concatenate %333, %347 in 1 : vector<8x32xf32>, vector<8x32xf32> -> vector<8x64xf32>
    %350 = math.tanh %348 : vector<8x64xf32>
    %351 = arith.mulf %349, %350 : vector<8x64xf32>
    %352 = vector.broadcast %309 : i32 to vector<1x64xi32>
    %353 = vector.broadcast %310 : i32 to vector<1x64xi32>
    %354 = arith.select %7, %352, %353 : vector<1x64xi1>, vector<1x64xi32>
    %355 = vector.broadcast %4 : vector<8x1xi32> to vector<8x64xi32>
    %356 = vector.broadcast %354 : vector<1x64xi32> to vector<8x64xi32>
    %357 = arith.cmpi sgt, %355, %356 : vector<8x64xi32>
    %c0_159 = arith.constant 0 : index
    %c0_160 = arith.constant 0 : index
    %358 = vector.load %arg7[%c0_159, %c0_160] : memref<8x64xf32, #tpu.memory_space<vmem>>, vector<8x64xf32>
    %359 = arith.select %357, %348, %358 : vector<8x64xi1>, vector<8x64xf32>
    %c0_161 = arith.constant 0 : index
    %c0_162 = arith.constant 0 : index
    %360 = vector.load %arg7[%c0_161, %c0_162] : memref<8x64xf32, #tpu.memory_space<vmem>>, vector<8x64xf32>
    tpu.vector_store %arg7[%c0_161, %c0_162], %359 {strides = array<i32>} : memref<8x64xf32, #tpu.memory_space<vmem>>, vector<8x64xf32>,
    %c0_163 = arith.constant 0 : index
    %c0_164 = arith.constant 0 : index
    %361 = vector.load %arg6[%c0_163, %c0_164] : memref<8x64xf32, #tpu.memory_space<vmem>>, vector<8x64xf32>
    %362 = arith.select %357, %351, %361 : vector<8x64xi1>, vector<8x64xf32>
    %c0_165 = arith.constant 0 : index
    %c0_166 = arith.constant 0 : index
    %363 = vector.load %arg6[%c0_165, %c0_166] : memref<8x64xf32, #tpu.memory_space<vmem>>, vector<8x64xf32>
    tpu.vector_store %arg6[%c0_165, %c0_166], %362 {strides = array<i32>} : memref<8x64xf32, #tpu.memory_space<vmem>>, vector<8x64xf32>,
    %cst_167 = arith.constant 0.000000e+00 : f32
    %364 = vector.broadcast %cst_167 : f32 to vector<8x64xf32>
    %365 = arith.select %357, %351, %364 : vector<8x64xi1>, vector<8x64xf32>
    %c0_168 = arith.constant 0 : index
    %c0_169 = arith.constant 0 : index
    %c320 = arith.constant 320 : index
    %366 = vector.load %arg5[%c0_168, %c0_169, %c320] : memref<1x8x512xf32, #tpu.memory_space<vmem>>, vector<1x8x64xf32>
    %367 = vector.shape_cast %366 : vector<1x8x64xf32> to vector<8x64xf32>
    %368 = vector.shape_cast %365 : vector<8x64xf32> to vector<1x8x64xf32>
    tpu.vector_store %arg5[%c0_168, %c0_169, %c320], %368 {strides = array<i32>} : memref<1x8x512xf32, #tpu.memory_space<vmem>>, vector<1x8x64xf32>,
    %c6_i32 = arith.constant 6 : i32
    %369 = arith.addi %8, %c6_i32 : i32
    %c7_i32_170 = arith.constant 7 : i32
    %370 = arith.subi %c7_i32_170, %369 : i32
    %c0_171 = arith.constant 0 : index
    %c0_172 = arith.constant 0 : index
    %371 = vector.load %arg6[%c0_171, %c0_172] : memref<8x64xf32, #tpu.memory_space<vmem>>, vector<8x64xf32>
    %cst_173 = arith.constant dense<0.000000e+00> : vector<8x256xf32>
    %372 = tpu.matmul %371, %3, %cst_173 {dimension_numbers = #tpu.dot_dimension_numbers<[1], [0], [0], [1], [0, 0, 1, 1], [], []>} : vector<8x64xf32>, vector<64x256xf32>, vector<8x256xf32> -> vector<8x256xf32>
    %c6_174 = arith.constant 6 : index
    %c0_175 = arith.constant 0 : index
    %c0_176 = arith.constant 0 : index
    %373 = vector.load %arg2[%c6_174, %c0_175, %c0_176] : memref<8x8x128xf32, #tpu.memory_space<vmem>>, vector<1x8x128xf32>
    %374 = vector.shape_cast %373 : vector<1x8x128xf32> to vector<8x128xf32>
    %c1_177 = arith.constant 1 : index
    %c0_178 = arith.constant 0 : index
    %c0_179 = arith.constant 0 : index
    %375 = vector.load %arg3[%c1_177, %c0_178, %c0_179] : memref<8x8x128xf32, #tpu.memory_space<vmem>>, vector<1x8x128xf32>
    %376 = vector.shape_cast %375 : vector<1x8x128xf32> to vector<8x128xf32>
    %377 = tpu.concatenate %374, %376 in 1 : vector<8x128xf32>, vector<8x128xf32> -> vector<8x256xf32>
    %378 = arith.addf %377, %372 : vector<8x256xf32>
    %379 = math.tanh %378 : vector<8x256xf32>
    %380 = vector.extract_strided_slice %379 {offsets = [0, 0], sizes = [8, 128], strides = [1, 1]} : vector<8x256xf32> to vector<8x128xf32>
    %381 = vector.extract_strided_slice %380 {offsets = [0, 0], sizes = [8, 96], strides = [1, 1]} : vector<8x128xf32> to vector<8x96xf32>
    %cst_180 = arith.constant 5.000000e-01 : f32
    %382 = vector.broadcast %cst_180 : f32 to vector<8x96xf32>
    %383 = arith.mulf %382, %381 : vector<8x96xf32>
    %cst_181 = arith.constant 5.000000e-01 : f32
    %384 = vector.broadcast %cst_181 : f32 to vector<8x96xf32>
    %385 = arith.addf %384, %383 : vector<8x96xf32>
    %386 = vector.extract_strided_slice %385 {offsets = [0, 32], sizes = [8, 32], strides = [1, 1]} : vector<8x96xf32> to vector<8x32xf32>
    %c0_182 = arith.constant 0 : index
    %c0_183 = arith.constant 0 : index
    %387 = vector.load %arg7[%c0_182, %c0_183] : memref<8x64xf32, #tpu.memory_space<vmem>>, vector<8x32xf32>
    %388 = arith.mulf %386, %387 : vector<8x32xf32>
    %389 = vector.extract_strided_slice %385 {offsets = [0, 0], sizes = [8, 32], strides = [1, 1]} : vector<8x96xf32> to vector<8x32xf32>
    %390 = vector.extract_strided_slice %380 {offsets = [0, 96], sizes = [8, 32], strides = [1, 1]} : vector<8x128xf32> to vector<8x32xf32>
    %391 = arith.mulf %389, %390 : vector<8x32xf32>
    %392 = arith.addf %388, %391 : vector<8x32xf32>
    %393 = vector.extract_strided_slice %385 {offsets = [0, 64], sizes = [8, 32], strides = [1, 1]} : vector<8x96xf32> to vector<8x32xf32>
    %394 = vector.extract_strided_slice %379 {offsets = [0, 128], sizes = [8, 128], strides = [1, 1]} : vector<8x256xf32> to vector<8x128xf32>
    %395 = vector.extract_strided_slice %394 {offsets = [0, 0], sizes = [8, 96], strides = [1, 1]} : vector<8x128xf32> to vector<8x96xf32>
    %cst_184 = arith.constant 5.000000e-01 : f32
    %396 = vector.broadcast %cst_184 : f32 to vector<8x96xf32>
    %397 = arith.mulf %396, %395 : vector<8x96xf32>
    %cst_185 = arith.constant 5.000000e-01 : f32
    %398 = vector.broadcast %cst_185 : f32 to vector<8x96xf32>
    %399 = arith.addf %398, %397 : vector<8x96xf32>
    %400 = vector.extract_strided_slice %399 {offsets = [0, 32], sizes = [8, 32], strides = [1, 1]} : vector<8x96xf32> to vector<8x32xf32>
    %c0_186 = arith.constant 0 : index
    %c32_187 = arith.constant 32 : index
    %401 = vector.load %arg7[%c0_186, %c32_187] : memref<8x64xf32, #tpu.memory_space<vmem>>, vector<8x32xf32>
    %402 = arith.mulf %400, %401 : vector<8x32xf32>
    %403 = vector.extract_strided_slice %399 {offsets = [0, 0], sizes = [8, 32], strides = [1, 1]} : vector<8x96xf32> to vector<8x32xf32>
    %404 = vector.extract_strided_slice %394 {offsets = [0, 96], sizes = [8, 32], strides = [1, 1]} : vector<8x128xf32> to vector<8x32xf32>
    %405 = arith.mulf %403, %404 : vector<8x32xf32>
    %406 = arith.addf %402, %405 : vector<8x32xf32>
    %407 = vector.extract_strided_slice %399 {offsets = [0, 64], sizes = [8, 32], strides = [1, 1]} : vector<8x96xf32> to vector<8x32xf32>
    %408 = tpu.concatenate %392, %406 in 1 : vector<8x32xf32>, vector<8x32xf32> -> vector<8x64xf32>
    %409 = tpu.concatenate %393, %407 in 1 : vector<8x32xf32>, vector<8x32xf32> -> vector<8x64xf32>
    %410 = math.tanh %408 : vector<8x64xf32>
    %411 = arith.mulf %409, %410 : vector<8x64xf32>
    %412 = vector.broadcast %369 : i32 to vector<1x64xi32>
    %413 = vector.broadcast %370 : i32 to vector<1x64xi32>
    %414 = arith.select %7, %412, %413 : vector<1x64xi1>, vector<1x64xi32>
    %415 = vector.broadcast %4 : vector<8x1xi32> to vector<8x64xi32>
    %416 = vector.broadcast %414 : vector<1x64xi32> to vector<8x64xi32>
    %417 = arith.cmpi sgt, %415, %416 : vector<8x64xi32>
    %c0_188 = arith.constant 0 : index
    %c0_189 = arith.constant 0 : index
    %418 = vector.load %arg7[%c0_188, %c0_189] : memref<8x64xf32, #tpu.memory_space<vmem>>, vector<8x64xf32>
    %419 = arith.select %417, %408, %418 : vector<8x64xi1>, vector<8x64xf32>
    %c0_190 = arith.constant 0 : index
    %c0_191 = arith.constant 0 : index
    %420 = vector.load %arg7[%c0_190, %c0_191] : memref<8x64xf32, #tpu.memory_space<vmem>>, vector<8x64xf32>
    tpu.vector_store %arg7[%c0_190, %c0_191], %419 {strides = array<i32>} : memref<8x64xf32, #tpu.memory_space<vmem>>, vector<8x64xf32>,
    %c0_192 = arith.constant 0 : index
    %c0_193 = arith.constant 0 : index
    %421 = vector.load %arg6[%c0_192, %c0_193] : memref<8x64xf32, #tpu.memory_space<vmem>>, vector<8x64xf32>
    %422 = arith.select %417, %411, %421 : vector<8x64xi1>, vector<8x64xf32>
    %c0_194 = arith.constant 0 : index
    %c0_195 = arith.constant 0 : index
    %423 = vector.load %arg6[%c0_194, %c0_195] : memref<8x64xf32, #tpu.memory_space<vmem>>, vector<8x64xf32>
    tpu.vector_store %arg6[%c0_194, %c0_195], %422 {strides = array<i32>} : memref<8x64xf32, #tpu.memory_space<vmem>>, vector<8x64xf32>,
    %cst_196 = arith.constant 0.000000e+00 : f32
    %424 = vector.broadcast %cst_196 : f32 to vector<8x64xf32>
    %425 = arith.select %417, %411, %424 : vector<8x64xi1>, vector<8x64xf32>
    %c0_197 = arith.constant 0 : index
    %c0_198 = arith.constant 0 : index
    %c384 = arith.constant 384 : index
    %426 = vector.load %arg5[%c0_197, %c0_198, %c384] : memref<1x8x512xf32, #tpu.memory_space<vmem>>, vector<1x8x64xf32>
    %427 = vector.shape_cast %426 : vector<1x8x64xf32> to vector<8x64xf32>
    %428 = vector.shape_cast %425 : vector<8x64xf32> to vector<1x8x64xf32>
    tpu.vector_store %arg5[%c0_197, %c0_198, %c384], %428 {strides = array<i32>} : memref<1x8x512xf32, #tpu.memory_space<vmem>>, vector<1x8x64xf32>,
    %c7_i32_199 = arith.constant 7 : i32
    %429 = arith.addi %8, %c7_i32_199 : i32
    %c7_i32_200 = arith.constant 7 : i32
    %430 = arith.subi %c7_i32_200, %429 : i32
    %c0_201 = arith.constant 0 : index
    %c0_202 = arith.constant 0 : index
    %431 = vector.load %arg6[%c0_201, %c0_202] : memref<8x64xf32, #tpu.memory_space<vmem>>, vector<8x64xf32>
    %cst_203 = arith.constant dense<0.000000e+00> : vector<8x256xf32>
    %432 = tpu.matmul %431, %3, %cst_203 {dimension_numbers = #tpu.dot_dimension_numbers<[1], [0], [0], [1], [0, 0, 1, 1], [], []>} : vector<8x64xf32>, vector<64x256xf32>, vector<8x256xf32> -> vector<8x256xf32>
    %c7_204 = arith.constant 7 : index
    %c0_205 = arith.constant 0 : index
    %c0_206 = arith.constant 0 : index
    %433 = vector.load %arg2[%c7_204, %c0_205, %c0_206] : memref<8x8x128xf32, #tpu.memory_space<vmem>>, vector<1x8x128xf32>
    %434 = vector.shape_cast %433 : vector<1x8x128xf32> to vector<8x128xf32>
    %c0_207 = arith.constant 0 : index
    %c0_208 = arith.constant 0 : index
    %c0_209 = arith.constant 0 : index
    %435 = vector.load %arg3[%c0_207, %c0_208, %c0_209] : memref<8x8x128xf32, #tpu.memory_space<vmem>>, vector<1x8x128xf32>
    %436 = vector.shape_cast %435 : vector<1x8x128xf32> to vector<8x128xf32>
    %437 = tpu.concatenate %434, %436 in 1 : vector<8x128xf32>, vector<8x128xf32> -> vector<8x256xf32>
    %438 = arith.addf %437, %432 : vector<8x256xf32>
    %439 = math.tanh %438 : vector<8x256xf32>
    %440 = vector.extract_strided_slice %439 {offsets = [0, 0], sizes = [8, 128], strides = [1, 1]} : vector<8x256xf32> to vector<8x128xf32>
    %441 = vector.extract_strided_slice %440 {offsets = [0, 0], sizes = [8, 96], strides = [1, 1]} : vector<8x128xf32> to vector<8x96xf32>
    %cst_210 = arith.constant 5.000000e-01 : f32
    %442 = vector.broadcast %cst_210 : f32 to vector<8x96xf32>
    %443 = arith.mulf %442, %441 : vector<8x96xf32>
    %cst_211 = arith.constant 5.000000e-01 : f32
    %444 = vector.broadcast %cst_211 : f32 to vector<8x96xf32>
    %445 = arith.addf %444, %443 : vector<8x96xf32>
    %446 = vector.extract_strided_slice %445 {offsets = [0, 32], sizes = [8, 32], strides = [1, 1]} : vector<8x96xf32> to vector<8x32xf32>
    %c0_212 = arith.constant 0 : index
    %c0_213 = arith.constant 0 : index
    %447 = vector.load %arg7[%c0_212, %c0_213] : memref<8x64xf32, #tpu.memory_space<vmem>>, vector<8x32xf32>
    %448 = arith.mulf %446, %447 : vector<8x32xf32>
    %449 = vector.extract_strided_slice %445 {offsets = [0, 0], sizes = [8, 32], strides = [1, 1]} : vector<8x96xf32> to vector<8x32xf32>
    %450 = vector.extract_strided_slice %440 {offsets = [0, 96], sizes = [8, 32], strides = [1, 1]} : vector<8x128xf32> to vector<8x32xf32>
    %451 = arith.mulf %449, %450 : vector<8x32xf32>
    %452 = arith.addf %448, %451 : vector<8x32xf32>
    %453 = vector.extract_strided_slice %445 {offsets = [0, 64], sizes = [8, 32], strides = [1, 1]} : vector<8x96xf32> to vector<8x32xf32>
    %454 = vector.extract_strided_slice %439 {offsets = [0, 128], sizes = [8, 128], strides = [1, 1]} : vector<8x256xf32> to vector<8x128xf32>
    %455 = vector.extract_strided_slice %454 {offsets = [0, 0], sizes = [8, 96], strides = [1, 1]} : vector<8x128xf32> to vector<8x96xf32>
    %cst_214 = arith.constant 5.000000e-01 : f32
    %456 = vector.broadcast %cst_214 : f32 to vector<8x96xf32>
    %457 = arith.mulf %456, %455 : vector<8x96xf32>
    %cst_215 = arith.constant 5.000000e-01 : f32
    %458 = vector.broadcast %cst_215 : f32 to vector<8x96xf32>
    %459 = arith.addf %458, %457 : vector<8x96xf32>
    %460 = vector.extract_strided_slice %459 {offsets = [0, 32], sizes = [8, 32], strides = [1, 1]} : vector<8x96xf32> to vector<8x32xf32>
    %c0_216 = arith.constant 0 : index
    %c32_217 = arith.constant 32 : index
    %461 = vector.load %arg7[%c0_216, %c32_217] : memref<8x64xf32, #tpu.memory_space<vmem>>, vector<8x32xf32>
    %462 = arith.mulf %460, %461 : vector<8x32xf32>
    %463 = vector.extract_strided_slice %459 {offsets = [0, 0], sizes = [8, 32], strides = [1, 1]} : vector<8x96xf32> to vector<8x32xf32>
    %464 = vector.extract_strided_slice %454 {offsets = [0, 96], sizes = [8, 32], strides = [1, 1]} : vector<8x128xf32> to vector<8x32xf32>
    %465 = arith.mulf %463, %464 : vector<8x32xf32>
    %466 = arith.addf %462, %465 : vector<8x32xf32>
    %467 = vector.extract_strided_slice %459 {offsets = [0, 64], sizes = [8, 32], strides = [1, 1]} : vector<8x96xf32> to vector<8x32xf32>
    %468 = tpu.concatenate %452, %466 in 1 : vector<8x32xf32>, vector<8x32xf32> -> vector<8x64xf32>
    %469 = tpu.concatenate %453, %467 in 1 : vector<8x32xf32>, vector<8x32xf32> -> vector<8x64xf32>
    %470 = math.tanh %468 : vector<8x64xf32>
    %471 = arith.mulf %469, %470 : vector<8x64xf32>
    %472 = vector.broadcast %429 : i32 to vector<1x64xi32>
    %473 = vector.broadcast %430 : i32 to vector<1x64xi32>
    %474 = arith.select %7, %472, %473 : vector<1x64xi1>, vector<1x64xi32>
    %475 = vector.broadcast %4 : vector<8x1xi32> to vector<8x64xi32>
    %476 = vector.broadcast %474 : vector<1x64xi32> to vector<8x64xi32>
    %477 = arith.cmpi sgt, %475, %476 : vector<8x64xi32>
    %c0_218 = arith.constant 0 : index
    %c0_219 = arith.constant 0 : index
    %478 = vector.load %arg7[%c0_218, %c0_219] : memref<8x64xf32, #tpu.memory_space<vmem>>, vector<8x64xf32>
    %479 = arith.select %477, %468, %478 : vector<8x64xi1>, vector<8x64xf32>
    %c0_220 = arith.constant 0 : index
    %c0_221 = arith.constant 0 : index
    %480 = vector.load %arg7[%c0_220, %c0_221] : memref<8x64xf32, #tpu.memory_space<vmem>>, vector<8x64xf32>
    tpu.vector_store %arg7[%c0_220, %c0_221], %479 {strides = array<i32>} : memref<8x64xf32, #tpu.memory_space<vmem>>, vector<8x64xf32>,
    %c0_222 = arith.constant 0 : index
    %c0_223 = arith.constant 0 : index
    %481 = vector.load %arg6[%c0_222, %c0_223] : memref<8x64xf32, #tpu.memory_space<vmem>>, vector<8x64xf32>
    %482 = arith.select %477, %471, %481 : vector<8x64xi1>, vector<8x64xf32>
    %c0_224 = arith.constant 0 : index
    %c0_225 = arith.constant 0 : index
    %483 = vector.load %arg6[%c0_224, %c0_225] : memref<8x64xf32, #tpu.memory_space<vmem>>, vector<8x64xf32>
    tpu.vector_store %arg6[%c0_224, %c0_225], %482 {strides = array<i32>} : memref<8x64xf32, #tpu.memory_space<vmem>>, vector<8x64xf32>,
    %cst_226 = arith.constant 0.000000e+00 : f32
    %484 = vector.broadcast %cst_226 : f32 to vector<8x64xf32>
    %485 = arith.select %477, %471, %484 : vector<8x64xi1>, vector<8x64xf32>
    %c0_227 = arith.constant 0 : index
    %c0_228 = arith.constant 0 : index
    %c448 = arith.constant 448 : index
    %486 = vector.load %arg5[%c0_227, %c0_228, %c448] : memref<1x8x512xf32, #tpu.memory_space<vmem>>, vector<1x8x64xf32>
    %487 = vector.shape_cast %486 : vector<1x8x64xf32> to vector<8x64xf32>
    %488 = vector.shape_cast %485 : vector<8x64xf32> to vector<1x8x64xf32>
    tpu.vector_store %arg5[%c0_227, %c0_228, %c448], %488 {strides = array<i32>} : memref<1x8x512xf32, #tpu.memory_space<vmem>>, vector<1x8x64xf32>,
    return
  }
  func.func @transform_0(%arg0: i32) -> (i32, i32) {
    %c0_i32 = arith.constant 0 : i32
    %c0_i32_0 = arith.constant 0 : i32
    %c0_i32_1 = arith.constant 0 : i32
    return %c0_i32, %c0_i32_0 : i32, i32
  }
  func.func @transform_1(%arg0: i32) -> (i32, i32, i32) {
    %c0_i32 = arith.constant 0 : i32
    %c0_i32_0 = arith.constant 0 : i32
    %c0_i32_1 = arith.constant 0 : i32
    return %arg0, %c0_i32, %c0_i32_0 : i32, i32, i32
  }
  func.func @transform_2(%arg0: i32) -> (i32, i32, i32) {
    %c0_i32 = arith.constant 0 : i32
    %0 = arith.subi %c0_i32, %arg0 : i32
    %c0_i32_0 = arith.constant 0 : i32
    %c0_i32_1 = arith.constant 0 : i32
    %c0_i32_2 = arith.constant 0 : i32
    return %0, %c0_i32_0, %c0_i32_1 : i32, i32, i32
  }
  func.func @transform_3(%arg0: i32) -> (i32, i32) {
    %c0_i32 = arith.constant 0 : i32
    %c0_i32_0 = arith.constant 0 : i32
    %c0_i32_1 = arith.constant 0 : i32
    return %c0_i32, %c0_i32_0 : i32, i32
  }
  func.func @transform_4(%arg0: i32) -> (i32, i32, i32) {
    %c0_i32 = arith.constant 0 : i32
    %c0_i32_0 = arith.constant 0 : i32
    %c0_i32_1 = arith.constant 0 : i32
    return %arg0, %c0_i32, %c0_i32_0 : i32, i32, i32
  }
}

</mosaic_0001>

<llo_original>
// kernel: encoder_forward.1
$region0: #{encoder_forward.1}
  #allocation0 [shape = 'u32[]', space=smem, size = 0x4, offset = 0x4, fixed_abs, tag = 'smem constant byte address 0x4 - core index']
  #allocation1 [shape = 'u32[144,128]{1,0:T(1,128)}', space=vmem, size = 0x12000, scoped, tag = 'internal scratch']
  #allocation2 [shape = 'f32[8,64]{1,0:T(8,128)}', space=vmem, size = 0x1000, scoped, tag = 'scratch operand']
  #allocation3 [shape = 'f32[8,64]{1,0:T(8,128)}', space=vmem, size = 0x1000, scoped, tag = 'scratch operand']
  %s0 = inlined_call_operand.vmem [shape: s32[8,1], index: 0, kind: input, shape index: {}]
  %s1 = inlined_call_operand.vmem [shape: f32[8,8,128], index: 1, kind: input, shape index: {}]
  %s2 = inlined_call_operand.vmem [shape: f32[8,8,128], index: 2, kind: input, shape index: {}]
  %s3 = inlined_call_operand.vmem [shape: f32[64,256], index: 3, kind: input, shape index: {}]
  %s4 = inlined_call_operand.vmem [shape: f32[1,8,512], index: 4, kind: output, shape index: {}]
  %s5 = sld [smem:[#allocation0]]
  $region30: #{encoder_forward.1} parent=0
    _
  %s7 = ssub.s32 1, %s5
  %s8 = scalar_select 0, %s7, %s5
  // Predicated region
  $region2: #{encoder_forward.1} parent=0 // pred_check
    _
  $region3: #{encoder_forward.1} parent=0 // pred_check_branch
    %10 = sbr.rel (0) target = $region5
  $region4: #{encoder_forward.1} parent=0 // pred_region
    _
  $region5: #{encoder_forward.1} parent=0 // pred_fallthru
    _
  // Predicated region
  $region6: #{encoder_forward.1} parent=0 // pred_check
    _
  $region7: #{encoder_forward.1} parent=0 // pred_check_branch
    %12 = sbr.rel (0) target = $region9
  $region8: #{encoder_forward.1} parent=0 // pred_region
    _
  $region9: #{encoder_forward.1} parent=0 // pred_fallthru
    _
  // Predicated region
  $region10: #{encoder_forward.1} parent=0 // pred_check
    _
  $region11: #{encoder_forward.1} parent=0 // pred_check_branch
    %14 = sbr.rel (0) target = $region13
  $region12: #{encoder_forward.1} parent=0 // pred_region
    %s15 = ssub.s32 0, 0
    %s16 = smul.u32 8, %s15
    %p17 = scmp.lt.s32.totalorder %s16, 7
    %s18 = scalar_select %p17, %s16, 7
    %s19 = smul.addr %s18, 8
    %s20 = scalar_lea.vmem %s2, %s19
    %s21 = ssub.s32 0, 0
    %s22 = smul.u32 8, %s21
  $region13: #{encoder_forward.1} parent=0 // pred_fallthru
    _
  // Predicated region
  $region14: #{encoder_forward.1} parent=0 // pred_check
    _
  $region15: #{encoder_forward.1} parent=0 // pred_check_branch
    %24 = sbr.rel (0) target = $region17
  $region16: #{encoder_forward.1} parent=0 // pred_region
    _
  $region17: #{encoder_forward.1} parent=0 // pred_fallthru
    _
  %s25 = ssub.s32 0, 0
  %s26 = smul.u32 8, %s25
  %p27 = scmp.lt.s32.totalorder %s26, 7
  %s28 = scalar_select %p27, %s26, 7
  %s29 = smul.addr %s28, 8
  %s30 = scalar_lea.vmem %s2, %s29
  %s31 = ssub.s32 0, 0
  %s32 = smul.u32 8, %s31
  %p33 = scmp.lt.s32.totalorder %s32, 7
  %s34 = scalar_select %p33, %s32, 7
  %s35 = smul.addr %s34, 8
  %s36 = scalar_lea.vmem %s2, %s35
  %s37 = ssub.s32 0, 0
  %s38 = smul.u32 8, %s37
  %p39 = scmp.eq.s32.totalorder 0, 0
  // Predicated region
  $region18: #{encoder_forward.1} parent=0 // pred_check
    %p40 = pneg %p39
  $region19: #{encoder_forward.1} parent=0 // pred_check_branch
    %42 = sbr.rel (%p40) target = $region21
  $region20: #{encoder_forward.1} parent=0 // pred_region
    %vm43 = vcmask 523264
    %44 = vst.msk [vmem:[#allocation2] sm:$0xff] %vm43, 0.0
    %45 = vst.msk [vmem:[#allocation3] sm:$0xff] %vm43, 0.0
  $region21: #{encoder_forward.1} parent=0 // pred_fallthru
    _
  %v46 = vld [vmem:[%s3] sm:$0xff]
  %v47 = vld [vmem:[%s3 + $0x8] sm:$0xff]
  %v48 = vld [vmem:[%s3 + $0x10] sm:$0xff]
  %v49 = vld [vmem:[%s3 + $0x18] sm:$0xff]
  %v50 = vld [vmem:[%s3 + $0x20] sm:$0xff]
  %v51 = vld [vmem:[%s3 + $0x28] sm:$0xff]
  %v52 = vld [vmem:[%s3 + $0x30] sm:$0xff]
  %v53 = vld [vmem:[%s3 + $0x38] sm:$0xff]
  %v54 = vld [vmem:[%s3 + $0x40] sm:$0xff]
  %v55 = vld [vmem:[%s3 + $0x48] sm:$0xff]
  %v56 = vld [vmem:[%s3 + $0x50] sm:$0xff]
  %v57 = vld [vmem:[%s3 + $0x58] sm:$0xff]
  %v58 = vld [vmem:[%s3 + $0x60] sm:$0xff]
  %v59 = vld [vmem:[%s3 + $0x68] sm:$0xff]
  %v60 = vld [vmem:[%s3 + $0x70] sm:$0xff]
  %v61 = vld [vmem:[%s3 + $0x78] sm:$0xff]
  %v62 = vld [vmem:[%s0] sm:$0xff]
  %v63 = vlaneseq
  %v64 = vand.u32 %v63, 127
  %vm65 = vcmp.lt.s32.totalorder %v64, 32
  %s66 = smul.u32 0, 8
  %s67 = ssub.s32 7, %s66
  %v68 = vld [vmem:[#allocation2] sm:$0xff]
  %vm69 = vcmask 523264
  %v71 = vsel %vm69, %v68, 0
  %73 = vmatprep.subr.mxu0 %v47
  %74 = vmatpush1.msra.mxu0 %v46
  %75 = vmatprep.subr.mxu0 %v49
  %76 = vmatpush1.msra.mxu0 %v48
  %77 = vmatprep.subr.mxu0 %v51
  %78 = vmatpush1.msra.mxu0 %v50
  %79 = vmatprep.subr.mxu0 %v53
  %80 = vmatpush1.msra.mxu0 %v52
  %81 = vmatprep.subr.mxu0 %v55
  %82 = vmatpush1.msra.mxu0 %v54
  %83 = vmatprep.subr.mxu0 %v57
  %84 = vmatpush1.msra.mxu0 %v56
  %85 = vmatprep.subr.mxu0 %v59
  %86 = vmatpush1.msra.mxu0 %v58
  %87 = vmatprep.subr.mxu0 %v61
  %88 = vmatpush1.msra.mxu0 %v60
  %89 = vmatprep.subr.mxu0 0.0
  %90 = vmatpush1.msra.mxu0 0.0
  %91 = vmatprep.subr.mxu0 0.0
  %92 = vmatpush1.msra.mxu0 0.0
  %93 = vmatprep.subr.mxu0 0.0
  %94 = vmatpush1.msra.mxu0 0.0
  %95 = vmatprep.subr.mxu0 0.0
  %96 = vmatpush1.msra.mxu0 0.0
  %97 = vmatprep.subr.mxu0 0.0
  %98 = vmatpush1.msra.mxu0 0.0
  %99 = vmatprep.subr.mxu0 0.0
  %100 = vmatpush1.msra.mxu0 0.0
  %101 = vmatprep.subr.mxu0 0.0
  %102 = vmatpush1.msra.mxu0 0.0
  %103 = vmatprep.subr.mxu0 0.0
  %104 = vmatpush1.msra.mxu0 0.0
  %105 = vmatprep.subr.mxu0 0.0
  %106 = vmatpush1.msra.mxu0 0.0
  %107 = vmatprep.subr.mxu0 0.0
  %108 = vmatpush1.msra.mxu0 0.0
  %109 = vmatprep.subr.mxu0 0.0
  %110 = vmatpush1.msra.mxu0 0.0
  %111 = vmatprep.subr.mxu0 0.0
  %112 = vmatpush1.msra.mxu0 0.0
  %113 = vmatprep.subr.mxu0 0.0
  %114 = vmatpush1.msra.mxu0 0.0
  %115 = vmatprep.subr.mxu0 0.0
  %116 = vmatpush1.msra.mxu0 0.0
  %117 = vmatprep.subr.mxu0 0.0
  %118 = vmatpush1.msra.mxu0 0.0
  %119 = vmatprep.subr.mxu0 0.0
  %120 = vmatpush1.msra.mxu0 0.0
  %121 = vmatprep.subr.mxu0 0.0
  %122 = vmatpush1.msra.mxu0 0.0
  %123 = vmatprep.subr.mxu0 0.0
  %124 = vmatpush1.msra.mxu0 0.0
  %125 = vmatprep.subr.mxu0 0.0
  %126 = vmatpush1.msra.mxu0 0.0
  %127 = vmatprep.subr.mxu0 0.0
  %128 = vmatpush1.msra.mxu0 0.0
  %129 = vmatprep.subr.mxu0 0.0
  %130 = vmatpush1.msra.mxu0 0.0
  %131 = vmatprep.subr.mxu0 0.0
  %132 = vmatpush1.msra.mxu0 0.0
  %133 = vmatprep.subr.mxu0 0.0
  %134 = vmatpush1.msra.mxu0 0.0
  %135 = vmatprep.subr.mxu0 0.0
  %136 = vmatpush1.msra.mxu0 0.0
  %137 = vmatprep.mubr.f32.mxu0 0.0
  %138 = vmatmul.mubr.f32.gmra.mrb[0].mxu0 %v71
  %v139 = vpop.f32.mrb[0].mxu0
  %v140 = vadd.f32 0.0, %v139
  %v141 = vpop.f32.mrb[0].mxu0
  %v142 = vadd.f32 0.0, %v141
  %143 = vdwg.mxu0
  %v144 = vld [vmem:[%s1] sm:$0xff]
  %s145 = scalar_lea.vmem %s36, 56
  %v146 = vld [vmem:[%s145] sm:$0xff]
  %v147 = vadd.f32 %v144, %v140
  %v148 = vadd.f32 %v146, %v142
  %v149 = vtanh.pop %v147
  %v150 = vtanh.pop %v148
  %v151 = vmul.f32 %v149, 0.5
  %v152 = vadd.f32 %v151, 0.5
  %v153 = vld [vmem:[#allocation3] sm:$0xff]
  %155 = vrot.lane.b32.xlu0 %v153, 32
  %v156 = vpop.permute.xlu0 %155
  %v158 = vmul.f32 %v152, %v156
  %160 = vrot.lane.b32.xlu0 %v149, 32
  %v161 = vpop.permute.xlu0 %160
  %v163 = vmul.f32 %v152, %v161
  %165 = vrot.lane.b32.xlu0 %v163, 32
  %v166 = vpop.permute.xlu0 %165
  %v168 = vadd.f32 %v158, %v166
  %v169 = vmul.f32 %v150, 0.5
  %v170 = vadd.f32 %v169, 0.5
  %v171 = vmul.f32 %v170, %v153
  %173 = vrot.lane.b32.xlu0 %v150, 32
  %v174 = vpop.permute.xlu0 %173
  %v176 = vmul.f32 %v170, %v174
  %178 = vrot.lane.b32.xlu0 %v176, 32
  %v179 = vpop.permute.xlu0 %178
  %v181 = vadd.f32 %v171, %v179
  %183 = vrot.lane.b32.xlu0 %v168, 96
  %v184 = vpop.permute.xlu0 %183
  %vm186 = vcmask 261120
  %v187 = vsel %vm186, %v184, %v181
  %189 = vrot.lane.b32.xlu0 %v152, 64
  %v190 = vpop.permute.xlu0 %189
  %193 = vrot.lane.b32.xlu0 %v170, 96
  %v194 = vpop.permute.xlu0 %193
  %v196 = vsel %vm186, %v190, %v194
  %v197 = vtanh.pop %v187
  %v198 = vmul.f32 %v196, %v197
  %v199 = vstv %s66
  %v200 = vstv %s67
  %v201 = vsel %vm65, %v199, %v200
  %202 = vset.pattern.permute.xlu0 0
  %203 = vperm.xlu0 %202, %v62
  %v204 = vpop.permute.xlu0 %203
  %vm205 = vcmp.gt.s32.totalorder %v204, %v201
  %v206 = vsel %vm205, %v187, %v153
  %207 = vst.msk [vmem:[#allocation3] sm:$0xff] %vm69, %v206
  %v208 = vld [vmem:[#allocation2] sm:$0xff]
  %v209 = vsel %vm205, %v198, %v208
  %210 = vst.msk [vmem:[#allocation2] sm:$0xff] %vm69, %v209
  %v211 = vsel %vm205, %v198, 0.0
  %212 = vst.msk [vmem:[%s4] sm:$0xff] %vm69, %v211
  %s213 = sadd.s32 %s66, 1
  %s214 = ssub.s32 6, %s66
  %v215 = vld [vmem:[#allocation2] sm:$0xff]
  %v217 = vsel %vm69, %v215, 0
  %219 = vmatprep.subr.mxu0 %v47
  %220 = vmatpush1.msra.mxu0 %v46
  %221 = vmatprep.subr.mxu0 %v49
  %222 = vmatpush1.msra.mxu0 %v48
  %223 = vmatprep.subr.mxu0 %v51
  %224 = vmatpush1.msra.mxu0 %v50
  %225 = vmatprep.subr.mxu0 %v53
  %226 = vmatpush1.msra.mxu0 %v52
  %227 = vmatprep.subr.mxu0 %v55
  %228 = vmatpush1.msra.mxu0 %v54
  %229 = vmatprep.subr.mxu0 %v57
  %230 = vmatpush1.msra.mxu0 %v56
  %231 = vmatprep.subr.mxu0 %v59
  %232 = vmatpush1.msra.mxu0 %v58
  %233 = vmatprep.subr.mxu0 %v61
  %234 = vmatpush1.msra.mxu0 %v60
  %235 = vmatprep.subr.mxu0 0.0
  %236 = vmatpush1.msra.mxu0 0.0
  %237 = vmatprep.subr.mxu0 0.0
  %238 = vmatpush1.msra.mxu0 0.0
  %239 = vmatprep.subr.mxu0 0.0
  %240 = vmatpush1.msra.mxu0 0.0
  %241 = vmatprep.subr.mxu0 0.0
  %242 = vmatpush1.msra.mxu0 0.0
  %243 = vmatprep.subr.mxu0 0.0
  %244 = vmatpush1.msra.mxu0 0.0
  %245 = vmatprep.subr.mxu0 0.0
  %246 = vmatpush1.msra.mxu0 0.0
  %247 = vmatprep.subr.mxu0 0.0
  %248 = vmatpush1.msra.mxu0 0.0
  %249 = vmatprep.subr.mxu0 0.0
  %250 = vmatpush1.msra.mxu0 0.0
  %251 = vmatprep.subr.mxu0 0.0
  %252 = vmatpush1.msra.mxu0 0.0
  %253 = vmatprep.subr.mxu0 0.0
  %254 = vmatpush1.msra.mxu0 0.0
  %255 = vmatprep.subr.mxu0 0.0
  %256 = vmatpush1.msra.mxu0 0.0
  %257 = vmatprep.subr.mxu0 0.0
  %258 = vmatpush1.msra.mxu0 0.0
  %259 = vmatprep.subr.mxu0 0.0
  %260 = vmatpush1.msra.mxu0 0.0
  %261 = vmatprep.subr.mxu0 0.0
  %262 = vmatpush1.msra.mxu0 0.0
  %263 = vmatprep.subr.mxu0 0.0
  %264 = vmatpush1.msra.mxu0 0.0
  %265 = vmatprep.subr.mxu0 0.0
  %266 = vmatpush1.msra.mxu0 0.0
  %267 = vmatprep.subr.mxu0 0.0
  %268 = vmatpush1.msra.mxu0 0.0
  %269 = vmatprep.subr.mxu0 0.0
  %270 = vmatpush1.msra.mxu0 0.0
  %271 = vmatprep.subr.mxu0 0.0
  %272 = vmatpush1.msra.mxu0 0.0
  %273 = vmatprep.subr.mxu0 0.0
  %274 = vmatpush1.msra.mxu0 0.0
  %275 = vmatprep.subr.mxu0 0.0
  %276 = vmatpush1.msra.mxu0 0.0
  %277 = vmatprep.subr.mxu0 0.0
  %278 = vmatpush1.msra.mxu0 0.0
  %279 = vmatprep.subr.mxu0 0.0
  %280 = vmatpush1.msra.mxu0 0.0
  %281 = vmatprep.subr.mxu0 0.0
  %282 = vmatpush1.msra.mxu0 0.0
  %283 = vmatprep.mubr.f32.mxu0 0.0
  %284 = vmatmul.mubr.f32.gmra.mrb[0].mxu0 %v217
  %v285 = vpop.f32.mrb[0].mxu0
  %v286 = vadd.f32 0.0, %v285
  %v287 = vpop.f32.mrb[0].mxu0
  %v288 = vadd.f32 0.0, %v287
  %289 = vdwg.mxu0
  %s290 = scalar_lea.vmem %s1, 8
  %v291 = vld [vmem:[%s290] sm:$0xff]
  %s292 = scalar_lea.vmem %s36, 48
  %v293 = vld [vmem:[%s292] sm:$0xff]
  %v294 = vadd.f32 %v291, %v286
  %v295 = vadd.f32 %v293, %v288
  %v296 = vtanh.pop %v294
  %v297 = vtanh.pop %v295
  %v298 = vmul.f32 %v296, 0.5
  %v299 = vadd.f32 %v298, 0.5
  %v300 = vld [vmem:[#allocation3] sm:$0xff]
  %302 = vrot.lane.b32.xlu0 %v300, 32
  %v303 = vpop.permute.xlu0 %302
  %v305 = vmul.f32 %v299, %v303
  %307 = vrot.lane.b32.xlu0 %v296, 32
  %v308 = vpop.permute.xlu0 %307
  %v310 = vmul.f32 %v299, %v308
  %312 = vrot.lane.b32.xlu0 %v310, 32
  %v313 = vpop.permute.xlu0 %312
  %v315 = vadd.f32 %v305, %v313
  %v316 = vmul.f32 %v297, 0.5
  %v317 = vadd.f32 %v316, 0.5
  %v318 = vmul.f32 %v317, %v300
  %320 = vrot.lane.b32.xlu0 %v297, 32
  %v321 = vpop.permute.xlu0 %320
  %v323 = vmul.f32 %v317, %v321
  %325 = vrot.lane.b32.xlu0 %v323, 32
  %v326 = vpop.permute.xlu0 %325
  %v328 = vadd.f32 %v318, %v326
  %330 = vrot.lane.b32.xlu0 %v315, 96
  %v331 = vpop.permute.xlu0 %330
  %v333 = vsel %vm186, %v331, %v328
  %335 = vrot.lane.b32.xlu0 %v299, 64
  %v336 = vpop.permute.xlu0 %335
  %339 = vrot.lane.b32.xlu0 %v317, 96
  %v340 = vpop.permute.xlu0 %339
  %v342 = vsel %vm186, %v336, %v340
  %v343 = vtanh.pop %v333
  %v344 = vmul.f32 %v342, %v343
  %v345 = vstv %s213
  %v346 = vstv %s214
  %v347 = vsel %vm65, %v345, %v346
  %vm348 = vcmp.gt.s32.totalorder %v204, %v347
  %v349 = vsel %vm348, %v333, %v300
  %350 = vst.msk [vmem:[#allocation3] sm:$0xff] %vm69, %v349
  %v351 = vld [vmem:[#allocation2] sm:$0xff]
  %v352 = vsel %vm348, %v344, %v351
  %353 = vst.msk [vmem:[#allocation2] sm:$0xff] %vm69, %v352
  %v354 = vsel %vm348, %v344, 0.0
  %356 = vrot.lane.b32.xlu0 %v354, 64
  %v357 = vpop.permute.xlu0 %356
  %vm359 = vcmask 1048064
  %360 = vst.msk [vmem:[%s4] sm:$0xff] %vm359, %v357
  %s361 = sadd.s32 %s66, 2
  %s362 = ssub.s32 5, %s66
  %v363 = vld [vmem:[#allocation2] sm:$0xff]
  %v365 = vsel %vm69, %v363, 0
  %367 = vmatprep.subr.mxu0 %v47
  %368 = vmatpush1.msra.mxu0 %v46
  %369 = vmatprep.subr.mxu0 %v49
  %370 = vmatpush1.msra.mxu0 %v48
  %371 = vmatprep.subr.mxu0 %v51
  %372 = vmatpush1.msra.mxu0 %v50
  %373 = vmatprep.subr.mxu0 %v53
  %374 = vmatpush1.msra.mxu0 %v52
  %375 = vmatprep.subr.mxu0 %v55
  %376 = vmatpush1.msra.mxu0 %v54
  %377 = vmatprep.subr.mxu0 %v57
  %378 = vmatpush1.msra.mxu0 %v56
  %379 = vmatprep.subr.mxu0 %v59
  %380 = vmatpush1.msra.mxu0 %v58
  %381 = vmatprep.subr.mxu0 %v61
  %382 = vmatpush1.msra.mxu0 %v60
  %383 = vmatprep.subr.mxu0 0.0
  %384 = vmatpush1.msra.mxu0 0.0
  %385 = vmatprep.subr.mxu0 0.0
  %386 = vmatpush1.msra.mxu0 0.0
  %387 = vmatprep.subr.mxu0 0.0
  %388 = vmatpush1.msra.mxu0 0.0
  %389 = vmatprep.subr.mxu0 0.0
  %390 = vmatpush1.msra.mxu0 0.0
  %391 = vmatprep.subr.mxu0 0.0
  %392 = vmatpush1.msra.mxu0 0.0
  %393 = vmatprep.subr.mxu0 0.0
  %394 = vmatpush1.msra.mxu0 0.0
  %395 = vmatprep.subr.mxu0 0.0
  %396 = vmatpush1.msra.mxu0 0.0
  %397 = vmatprep.subr.mxu0 0.0
  %398 = vmatpush1.msra.mxu0 0.0
  %399 = vmatprep.subr.mxu0 0.0
  %400 = vmatpush1.msra.mxu0 0.0
  %401 = vmatprep.subr.mxu0 0.0
  %402 = vmatpush1.msra.mxu0 0.0
  %403 = vmatprep.subr.mxu0 0.0
  %404 = vmatpush1.msra.mxu0 0.0
  %405 = vmatprep.subr.mxu0 0.0
  %406 = vmatpush1.msra.mxu0 0.0
  %407 = vmatprep.subr.mxu0 0.0
  %408 = vmatpush1.msra.mxu0 0.0
  %409 = vmatprep.subr.mxu0 0.0
  %410 = vmatpush1.msra.mxu0 0.0
  %411 = vmatprep.subr.mxu0 0.0
  %412 = vmatpush1.msra.mxu0 0.0
  %413 = vmatprep.subr.mxu0 0.0
  %414 = vmatpush1.msra.mxu0 0.0
  %415 = vmatprep.subr.mxu0 0.0
  %416 = vmatpush1.msra.mxu0 0.0
  %417 = vmatprep.subr.mxu0 0.0
  %418 = vmatpush1.msra.mxu0 0.0
  %419 = vmatprep.subr.mxu0 0.0
  %420 = vmatpush1.msra.mxu0 0.0
  %421 = vmatprep.subr.mxu0 0.0
  %422 = vmatpush1.msra.mxu0 0.0
  %423 = vmatprep.subr.mxu0 0.0
  %424 = vmatpush1.msra.mxu0 0.0
  %425 = vmatprep.subr.mxu0 0.0
  %426 = vmatpush1.msra.mxu0 0.0
  %427 = vmatprep.subr.mxu0 0.0
  %428 = vmatpush1.msra.mxu0 0.0
  %429 = vmatprep.subr.mxu0 0.0
  %430 = vmatpush1.msra.mxu0 0.0
  %431 = vmatprep.mubr.f32.mxu0 0.0
  %432 = vmatmul.mubr.f32.gmra.mrb[0].mxu0 %v365
  %v433 = vpop.f32.mrb[0].mxu0
  %v434 = vadd.f32 0.0, %v433
  %v435 = vpop.f32.mrb[0].mxu0
  %v436 = vadd.f32 0.0, %v435
  %437 = vdwg.mxu0
  %s438 = scalar_lea.vmem %s1, 16
  %v439 = vld [vmem:[%s438] sm:$0xff]
  %s440 = scalar_lea.vmem %s36, 40
  %v441 = vld [vmem:[%s440] sm:$0xff]
  %v442 = vadd.f32 %v439, %v434
  %v443 = vadd.f32 %v441, %v436
  %v444 = vtanh.pop %v442
  %v445 = vtanh.pop %v443
  %v446 = vmul.f32 %v444, 0.5
  %v447 = vadd.f32 %v446, 0.5
  %v448 = vld [vmem:[#allocation3] sm:$0xff]
  %450 = vrot.lane.b32.xlu0 %v448, 32
  %v451 = vpop.permute.xlu0 %450
  %v453 = vmul.f32 %v447, %v451
  %455 = vrot.lane.b32.xlu0 %v444, 32
  %v456 = vpop.permute.xlu0 %455
  %v458 = vmul.f32 %v447, %v456
  %460 = vrot.lane.b32.xlu0 %v458, 32
  %v461 = vpop.permute.xlu0 %460
  %v463 = vadd.f32 %v453, %v461
  %v464 = vmul.f32 %v445, 0.5
  %v465 = vadd.f32 %v464, 0.5
  %v466 = vmul.f32 %v465, %v448
  %468 = vrot.lane.b32.xlu0 %v445, 32
  %v469 = vpop.permute.xlu0 %468
  %v471 = vmul.f32 %v465, %v469
  %473 = vrot.lane.b32.xlu0 %v471, 32
  %v474 = vpop.permute.xlu0 %473
  %v476 = vadd.f32 %v466, %v474
  %478 = vrot.lane.b32.xlu0 %v463, 96
  %v479 = vpop.permute.xlu0 %478
  %v481 = vsel %vm186, %v479, %v476
  %483 = vrot.lane.b32.xlu0 %v447, 64
  %v484 = vpop.permute.xlu0 %483
  %487 = vrot.lane.b32.xlu0 %v465, 96
  %v488 = vpop.permute.xlu0 %487
  %v490 = vsel %vm186, %v484, %v488
  %v491 = vtanh.pop %v481
  %v492 = vmul.f32 %v490, %v491
  %v493 = vstv %s361
  %v494 = vstv %s362
  %v495 = vsel %vm65, %v493, %v494
  %vm496 = vcmp.gt.s32.totalorder %v204, %v495
  %v497 = vsel %vm496, %v481, %v448
  %498 = vst.msk [vmem:[#allocation3] sm:$0xff] %vm69, %v497
  %v499 = vld [vmem:[#allocation2] sm:$0xff]
  %v500 = vsel %vm496, %v492, %v499
  %501 = vst.msk [vmem:[#allocation2] sm:$0xff] %vm69, %v500
  %v502 = vsel %vm496, %v492, 0.0
  %503 = vst.msk [vmem:[%s4 + $0x8] sm:$0xff] %vm69, %v502
  %s504 = sadd.s32 %s66, 3
  %s505 = ssub.s32 4, %s66
  %v506 = vld [vmem:[#allocation2] sm:$0xff]
  %v508 = vsel %vm69, %v506, 0
  %510 = vmatprep.subr.mxu0 %v47
  %511 = vmatpush1.msra.mxu0 %v46
  %512 = vmatprep.subr.mxu0 %v49
  %513 = vmatpush1.msra.mxu0 %v48
  %514 = vmatprep.subr.mxu0 %v51
  %515 = vmatpush1.msra.mxu0 %v50
  %516 = vmatprep.subr.mxu0 %v53
  %517 = vmatpush1.msra.mxu0 %v52
  %518 = vmatprep.subr.mxu0 %v55
  %519 = vmatpush1.msra.mxu0 %v54
  %520 = vmatprep.subr.mxu0 %v57
  %521 = vmatpush1.msra.mxu0 %v56
  %522 = vmatprep.subr.mxu0 %v59
  %523 = vmatpush1.msra.mxu0 %v58
  %524 = vmatprep.subr.mxu0 %v61
  %525 = vmatpush1.msra.mxu0 %v60
  %526 = vmatprep.subr.mxu0 0.0
  %527 = vmatpush1.msra.mxu0 0.0
  %528 = vmatprep.subr.mxu0 0.0
  %529 = vmatpush1.msra.mxu0 0.0
  %530 = vmatprep.subr.mxu0 0.0
  %531 = vmatpush1.msra.mxu0 0.0
  %532 = vmatprep.subr.mxu0 0.0
  %533 = vmatpush1.msra.mxu0 0.0
  %534 = vmatprep.subr.mxu0 0.0
  %535 = vmatpush1.msra.mxu0 0.0
  %536 = vmatprep.subr.mxu0 0.0
  %537 = vmatpush1.msra.mxu0 0.0
  %538 = vmatprep.subr.mxu0 0.0
  %539 = vmatpush1.msra.mxu0 0.0
  %540 = vmatprep.subr.mxu0 0.0
  %541 = vmatpush1.msra.mxu0 0.0
  %542 = vmatprep.subr.mxu0 0.0
  %543 = vmatpush1.msra.mxu0 0.0
  %544 = vmatprep.subr.mxu0 0.0
  %545 = vmatpush1.msra.mxu0 0.0
  %546 = vmatprep.subr.mxu0 0.0
  %547 = vmatpush1.msra.mxu0 0.0
  %548 = vmatprep.subr.mxu0 0.0
  %549 = vmatpush1.msra.mxu0 0.0
  %550 = vmatprep.subr.mxu0 0.0
  %551 = vmatpush1.msra.mxu0 0.0
  %552 = vmatprep.subr.mxu0 0.0
  %553 = vmatpush1.msra.mxu0 0.0
  %554 = vmatprep.subr.mxu0 0.0
  %555 = vmatpush1.msra.mxu0 0.0
  %556 = vmatprep.subr.mxu0 0.0
  %557 = vmatpush1.msra.mxu0 0.0
  %558 = vmatprep.subr.mxu0 0.0
  %559 = vmatpush1.msra.mxu0 0.0
  %560 = vmatprep.subr.mxu0 0.0
  %561 = vmatpush1.msra.mxu0 0.0
  %562 = vmatprep.subr.mxu0 0.0
  %563 = vmatpush1.msra.mxu0 0.0
  %564 = vmatprep.subr.mxu0 0.0
  %565 = vmatpush1.msra.mxu0 0.0
  %566 = vmatprep.subr.mxu0 0.0
  %567 = vmatpush1.msra.mxu0 0.0
  %568 = vmatprep.subr.mxu0 0.0
  %569 = vmatpush1.msra.mxu0 0.0
  %570 = vmatprep.subr.mxu0 0.0
  %571 = vmatpush1.msra.mxu0 0.0
  %572 = vmatprep.subr.mxu0 0.0
  %573 = vmatpush1.msra.mxu0 0.0
  %574 = vmatprep.mubr.f32.mxu0 0.0
  %575 = vmatmul.mubr.f32.gmra.mrb[0].mxu0 %v508
  %v576 = vpop.f32.mrb[0].mxu0
  %v577 = vadd.f32 0.0, %v576
  %v578 = vpop.f32.mrb[0].mxu0
  %v579 = vadd.f32 0.0, %v578
  %580 = vdwg.mxu0
  %s581 = scalar_lea.vmem %s1, 24
  %v582 = vld [vmem:[%s581] sm:$0xff]
  %s583 = scalar_lea.vmem %s36, 32
  %v584 = vld [vmem:[%s583] sm:$0xff]
  %v585 = vadd.f32 %v582, %v577
  %v586 = vadd.f32 %v584, %v579
  %v587 = vtanh.pop %v585
  %v588 = vtanh.pop %v586
  %v589 = vmul.f32 %v587, 0.5
  %v590 = vadd.f32 %v589, 0.5
  %v591 = vld [vmem:[#allocation3] sm:$0xff]
  %593 = vrot.lane.b32.xlu0 %v591, 32
  %v594 = vpop.permute.xlu0 %593
  %v596 = vmul.f32 %v590, %v594
  %598 = vrot.lane.b32.xlu0 %v587, 32
  %v599 = vpop.permute.xlu0 %598
  %v601 = vmul.f32 %v590, %v599
  %603 = vrot.lane.b32.xlu0 %v601, 32
  %v604 = vpop.permute.xlu0 %603
  %v606 = vadd.f32 %v596, %v604
  %v607 = vmul.f32 %v588, 0.5
  %v608 = vadd.f32 %v607, 0.5
  %v609 = vmul.f32 %v608, %v591
  %611 = vrot.lane.b32.xlu0 %v588, 32
  %v612 = vpop.permute.xlu0 %611
  %v614 = vmul.f32 %v608, %v612
  %616 = vrot.lane.b32.xlu0 %v614, 32
  %v617 = vpop.permute.xlu0 %616
  %v619 = vadd.f32 %v609, %v617
  %621 = vrot.lane.b32.xlu0 %v606, 96
  %v622 = vpop.permute.xlu0 %621
  %v624 = vsel %vm186, %v622, %v619
  %626 = vrot.lane.b32.xlu0 %v590, 64
  %v627 = vpop.permute.xlu0 %626
  %630 = vrot.lane.b32.xlu0 %v608, 96
  %v631 = vpop.permute.xlu0 %630
  %v633 = vsel %vm186, %v627, %v631
  %v634 = vtanh.pop %v624
  %v635 = vmul.f32 %v633, %v634
  %v636 = vstv %s504
  %v637 = vstv %s505
  %v638 = vsel %vm65, %v636, %v637
  %vm639 = vcmp.gt.s32.totalorder %v204, %v638
  %v640 = vsel %vm639, %v624, %v591
  %641 = vst.msk [vmem:[#allocation3] sm:$0xff] %vm69, %v640
  %v642 = vld [vmem:[#allocation2] sm:$0xff]
  %v643 = vsel %vm639, %v635, %v642
  %644 = vst.msk [vmem:[#allocation2] sm:$0xff] %vm69, %v643
  %v645 = vsel %vm639, %v635, 0.0
  %647 = vrot.lane.b32.xlu0 %v645, 64
  %v648 = vpop.permute.xlu0 %647
  %650 = vst.msk [vmem:[%s4 + $0x8] sm:$0xff] %vm359, %v648
  %s651 = sadd.s32 %s66, 4
  %s652 = ssub.s32 3, %s66
  %v653 = vld [vmem:[#allocation2] sm:$0xff]
  %v655 = vsel %vm69, %v653, 0
  %657 = vmatprep.subr.mxu0 %v47
  %658 = vmatpush1.msra.mxu0 %v46
  %659 = vmatprep.subr.mxu0 %v49
  %660 = vmatpush1.msra.mxu0 %v48
  %661 = vmatprep.subr.mxu0 %v51
  %662 = vmatpush1.msra.mxu0 %v50
  %663 = vmatprep.subr.mxu0 %v53
  %664 = vmatpush1.msra.mxu0 %v52
  %665 = vmatprep.subr.mxu0 %v55
  %666 = vmatpush1.msra.mxu0 %v54
  %667 = vmatprep.subr.mxu0 %v57
  %668 = vmatpush1.msra.mxu0 %v56
  %669 = vmatprep.subr.mxu0 %v59
  %670 = vmatpush1.msra.mxu0 %v58
  %671 = vmatprep.subr.mxu0 %v61
  %672 = vmatpush1.msra.mxu0 %v60
  %673 = vmatprep.subr.mxu0 0.0
  %674 = vmatpush1.msra.mxu0 0.0
  %675 = vmatprep.subr.mxu0 0.0
  %676 = vmatpush1.msra.mxu0 0.0
  %677 = vmatprep.subr.mxu0 0.0
  %678 = vmatpush1.msra.mxu0 0.0
  %679 = vmatprep.subr.mxu0 0.0
  %680 = vmatpush1.msra.mxu0 0.0
  %681 = vmatprep.subr.mxu0 0.0
  %682 = vmatpush1.msra.mxu0 0.0
  %683 = vmatprep.subr.mxu0 0.0
  %684 = vmatpush1.msra.mxu0 0.0
  %685 = vmatprep.subr.mxu0 0.0
  %686 = vmatpush1.msra.mxu0 0.0
  %687 = vmatprep.subr.mxu0 0.0
  %688 = vmatpush1.msra.mxu0 0.0
  %689 = vmatprep.subr.mxu0 0.0
  %690 = vmatpush1.msra.mxu0 0.0
  %691 = vmatprep.subr.mxu0 0.0
  %692 = vmatpush1.msra.mxu0 0.0
  %693 = vmatprep.subr.mxu0 0.0
  %694 = vmatpush1.msra.mxu0 0.0
  %695 = vmatprep.subr.mxu0 0.0
  %696 = vmatpush1.msra.mxu0 0.0
  %697 = vmatprep.subr.mxu0 0.0
  %698 = vmatpush1.msra.mxu0 0.0
  %699 = vmatprep.subr.mxu0 0.0
  %700 = vmatpush1.msra.mxu0 0.0
  %701 = vmatprep.subr.mxu0 0.0
  %702 = vmatpush1.msra.mxu0 0.0
  %703 = vmatprep.subr.mxu0 0.0
  %704 = vmatpush1.msra.mxu0 0.0
  %705 = vmatprep.subr.mxu0 0.0
  %706 = vmatpush1.msra.mxu0 0.0
  %707 = vmatprep.subr.mxu0 0.0
  %708 = vmatpush1.msra.mxu0 0.0
  %709 = vmatprep.subr.mxu0 0.0
  %710 = vmatpush1.msra.mxu0 0.0
  %711 = vmatprep.subr.mxu0 0.0
  %712 = vmatpush1.msra.mxu0 0.0
  %713 = vmatprep.subr.mxu0 0.0
  %714 = vmatpush1.msra.mxu0 0.0
  %715 = vmatprep.subr.mxu0 0.0
  %716 = vmatpush1.msra.mxu0 0.0
  %717 = vmatprep.subr.mxu0 0.0
  %718 = vmatpush1.msra.mxu0 0.0
  %719 = vmatprep.subr.mxu0 0.0
  %720 = vmatpush1.msra.mxu0 0.0
  %721 = vmatprep.mubr.f32.mxu0 0.0
  %722 = vmatmul.mubr.f32.gmra.mrb[0].mxu0 %v655
  %v723 = vpop.f32.mrb[0].mxu0
  %v724 = vadd.f32 0.0, %v723
  %v725 = vpop.f32.mrb[0].mxu0
  %v726 = vadd.f32 0.0, %v725
  %727 = vdwg.mxu0
  %s728 = scalar_lea.vmem %s1, 32
  %v729 = vld [vmem:[%s728] sm:$0xff]
  %s730 = scalar_lea.vmem %s36, 24
  %v731 = vld [vmem:[%s730] sm:$0xff]
  %v732 = vadd.f32 %v729, %v724
  %v733 = vadd.f32 %v731, %v726
  %v734 = vtanh.pop %v732
  %v735 = vtanh.pop %v733
  %v736 = vmul.f32 %v734, 0.5
  %v737 = vadd.f32 %v736, 0.5
  %v738 = vld [vmem:[#allocation3] sm:$0xff]
  %740 = vrot.lane.b32.xlu0 %v738, 32
  %v741 = vpop.permute.xlu0 %740
  %v743 = vmul.f32 %v737, %v741
  %745 = vrot.lane.b32.xlu0 %v734, 32
  %v746 = vpop.permute.xlu0 %745
  %v748 = vmul.f32 %v737, %v746
  %750 = vrot.lane.b32.xlu0 %v748, 32
  %v751 = vpop.permute.xlu0 %750
  %v753 = vadd.f32 %v743, %v751
  %v754 = vmul.f32 %v735, 0.5
  %v755 = vadd.f32 %v754, 0.5
  %v756 = vmul.f32 %v755, %v738
  %758 = vrot.lane.b32.xlu0 %v735, 32
  %v759 = vpop.permute.xlu0 %758
  %v761 = vmul.f32 %v755, %v759
  %763 = vrot.lane.b32.xlu0 %v761, 32
  %v764 = vpop.permute.xlu0 %763
  %v766 = vadd.f32 %v756, %v764
  %768 = vrot.lane.b32.xlu0 %v753, 96
  %v769 = vpop.permute.xlu0 %768
  %v771 = vsel %vm186, %v769, %v766
  %773 = vrot.lane.b32.xlu0 %v737, 64
  %v774 = vpop.permute.xlu0 %773
  %777 = vrot.lane.b32.xlu0 %v755, 96
  %v778 = vpop.permute.xlu0 %777
  %v780 = vsel %vm186, %v774, %v778
  %v781 = vtanh.pop %v771
  %v782 = vmul.f32 %v780, %v781
  %v783 = vstv %s651
  %v784 = vstv %s652
  %v785 = vsel %vm65, %v783, %v784
  %vm786 = vcmp.gt.s32.totalorder %v204, %v785
  %v787 = vsel %vm786, %v771, %v738
  %788 = vst.msk [vmem:[#allocation3] sm:$0xff] %vm69, %v787
  %v789 = vld [vmem:[#allocation2] sm:$0xff]
  %v790 = vsel %vm786, %v782, %v789
  %791 = vst.msk [vmem:[#allocation2] sm:$0xff] %vm69, %v790
  %v792 = vsel %vm786, %v782, 0.0
  %793 = vst.msk [vmem:[%s4 + $0x10] sm:$0xff] %vm69, %v792
  %s794 = sadd.s32 %s66, 5
  %s795 = ssub.s32 2, %s66
  %v796 = vld [vmem:[#allocation2] sm:$0xff]
  %v798 = vsel %vm69, %v796, 0
  %800 = vmatprep.subr.mxu0 %v47
  %801 = vmatpush1.msra.mxu0 %v46
  %802 = vmatprep.subr.mxu0 %v49
  %803 = vmatpush1.msra.mxu0 %v48
  %804 = vmatprep.subr.mxu0 %v51
  %805 = vmatpush1.msra.mxu0 %v50
  %806 = vmatprep.subr.mxu0 %v53
  %807 = vmatpush1.msra.mxu0 %v52
  %808 = vmatprep.subr.mxu0 %v55
  %809 = vmatpush1.msra.mxu0 %v54
  %810 = vmatprep.subr.mxu0 %v57
  %811 = vmatpush1.msra.mxu0 %v56
  %812 = vmatprep.subr.mxu0 %v59
  %813 = vmatpush1.msra.mxu0 %v58
  %814 = vmatprep.subr.mxu0 %v61
  %815 = vmatpush1.msra.mxu0 %v60
  %816 = vmatprep.subr.mxu0 0.0
  %817 = vmatpush1.msra.mxu0 0.0
  %818 = vmatprep.subr.mxu0 0.0
  %819 = vmatpush1.msra.mxu0 0.0
  %820 = vmatprep.subr.mxu0 0.0
  %821 = vmatpush1.msra.mxu0 0.0
  %822 = vmatprep.subr.mxu0 0.0
  %823 = vmatpush1.msra.mxu0 0.0
  %824 = vmatprep.subr.mxu0 0.0
  %825 = vmatpush1.msra.mxu0 0.0
  %826 = vmatprep.subr.mxu0 0.0
  %827 = vmatpush1.msra.mxu0 0.0
  %828 = vmatprep.subr.mxu0 0.0
  %829 = vmatpush1.msra.mxu0 0.0
  %830 = vmatprep.subr.mxu0 0.0
  %831 = vmatpush1.msra.mxu0 0.0
  %832 = vmatprep.subr.mxu0 0.0
  %833 = vmatpush1.msra.mxu0 0.0
  %834 = vmatprep.subr.mxu0 0.0
  %835 = vmatpush1.msra.mxu0 0.0
  %836 = vmatprep.subr.mxu0 0.0
  %837 = vmatpush1.msra.mxu0 0.0
  %838 = vmatprep.subr.mxu0 0.0
  %839 = vmatpush1.msra.mxu0 0.0
  %840 = vmatprep.subr.mxu0 0.0
  %841 = vmatpush1.msra.mxu0 0.0
  %842 = vmatprep.subr.mxu0 0.0
  %843 = vmatpush1.msra.mxu0 0.0
  %844 = vmatprep.subr.mxu0 0.0
  %845 = vmatpush1.msra.mxu0 0.0
  %846 = vmatprep.subr.mxu0 0.0
  %847 = vmatpush1.msra.mxu0 0.0
  %848 = vmatprep.subr.mxu0 0.0
  %849 = vmatpush1.msra.mxu0 0.0
  %850 = vmatprep.subr.mxu0 0.0
  %851 = vmatpush1.msra.mxu0 0.0
  %852 = vmatprep.subr.mxu0 0.0
  %853 = vmatpush1.msra.mxu0 0.0
  %854 = vmatprep.subr.mxu0 0.0
  %855 = vmatpush1.msra.mxu0 0.0
  %856 = vmatprep.subr.mxu0 0.0
  %857 = vmatpush1.msra.mxu0 0.0
  %858 = vmatprep.subr.mxu0 0.0
  %859 = vmatpush1.msra.mxu0 0.0
  %860 = vmatprep.subr.mxu0 0.0
  %861 = vmatpush1.msra.mxu0 0.0
  %862 = vmatprep.subr.mxu0 0.0
  %863 = vmatpush1.msra.mxu0 0.0
  %864 = vmatprep.mubr.f32.mxu0 0.0
  %865 = vmatmul.mubr.f32.gmra.mrb[0].mxu0 %v798
  %v866 = vpop.f32.mrb[0].mxu0
  %v867 = vadd.f32 0.0, %v866
  %v868 = vpop.f32.mrb[0].mxu0
  %v869 = vadd.f32 0.0, %v868
  %870 = vdwg.mxu0
  %s871 = scalar_lea.vmem %s1, 40
  %v872 = vld [vmem:[%s871] sm:$0xff]
  %s873 = scalar_lea.vmem %s36, 16
  %v874 = vld [vmem:[%s873] sm:$0xff]
  %v875 = vadd.f32 %v872, %v867
  %v876 = vadd.f32 %v874, %v869
  %v877 = vtanh.pop %v875
  %v878 = vtanh.pop %v876
  %v879 = vmul.f32 %v877, 0.5
  %v880 = vadd.f32 %v879, 0.5
  %v881 = vld [vmem:[#allocation3] sm:$0xff]
  %883 = vrot.lane.b32.xlu0 %v881, 32
  %v884 = vpop.permute.xlu0 %883
  %v886 = vmul.f32 %v880, %v884
  %888 = vrot.lane.b32.xlu0 %v877, 32
  %v889 = vpop.permute.xlu0 %888
  %v891 = vmul.f32 %v880, %v889
  %893 = vrot.lane.b32.xlu0 %v891, 32
  %v894 = vpop.permute.xlu0 %893
  %v896 = vadd.f32 %v886, %v894
  %v897 = vmul.f32 %v878, 0.5
  %v898 = vadd.f32 %v897, 0.5
  %v899 = vmul.f32 %v898, %v881
  %901 = vrot.lane.b32.xlu0 %v878, 32
  %v902 = vpop.permute.xlu0 %901
  %v904 = vmul.f32 %v898, %v902
  %906 = vrot.lane.b32.xlu0 %v904, 32
  %v907 = vpop.permute.xlu0 %906
  %v909 = vadd.f32 %v899, %v907
  %911 = vrot.lane.b32.xlu0 %v896, 96
  %v912 = vpop.permute.xlu0 %911
  %v914 = vsel %vm186, %v912, %v909
  %916 = vrot.lane.b32.xlu0 %v880, 64
  %v917 = vpop.permute.xlu0 %916
  %920 = vrot.lane.b32.xlu0 %v898, 96
  %v921 = vpop.permute.xlu0 %920
  %v923 = vsel %vm186, %v917, %v921
  %v924 = vtanh.pop %v914
  %v925 = vmul.f32 %v923, %v924
  %v926 = vstv %s794
  %v927 = vstv %s795
  %v928 = vsel %vm65, %v926, %v927
  %vm929 = vcmp.gt.s32.totalorder %v204, %v928
  %v930 = vsel %vm929, %v914, %v881
  %931 = vst.msk [vmem:[#allocation3] sm:$0xff] %vm69, %v930
  %v932 = vld [vmem:[#allocation2] sm:$0xff]
  %v933 = vsel %vm929, %v925, %v932
  %934 = vst.msk [vmem:[#allocation2] sm:$0xff] %vm69, %v933
  %v935 = vsel %vm929, %v925, 0.0
  %937 = vrot.lane.b32.xlu0 %v935, 64
  %v938 = vpop.permute.xlu0 %937
  %940 = vst.msk [vmem:[%s4 + $0x10] sm:$0xff] %vm359, %v938
  %s941 = sadd.s32 %s66, 6
  %s942 = ssub.s32 1, %s66
  %v943 = vld [vmem:[#allocation2] sm:$0xff]
  %v945 = vsel %vm69, %v943, 0
  %947 = vmatprep.subr.mxu0 %v47
  %948 = vmatpush1.msra.mxu0 %v46
  %949 = vmatprep.subr.mxu0 %v49
  %950 = vmatpush1.msra.mxu0 %v48
  %951 = vmatprep.subr.mxu0 %v51
  %952 = vmatpush1.msra.mxu0 %v50
  %953 = vmatprep.subr.mxu0 %v53
  %954 = vmatpush1.msra.mxu0 %v52
  %955 = vmatprep.subr.mxu0 %v55
  %956 = vmatpush1.msra.mxu0 %v54
  %957 = vmatprep.subr.mxu0 %v57
  %958 = vmatpush1.msra.mxu0 %v56
  %959 = vmatprep.subr.mxu0 %v59
  %960 = vmatpush1.msra.mxu0 %v58
  %961 = vmatprep.subr.mxu0 %v61
  %962 = vmatpush1.msra.mxu0 %v60
  %963 = vmatprep.subr.mxu0 0.0
  %964 = vmatpush1.msra.mxu0 0.0
  %965 = vmatprep.subr.mxu0 0.0
  %966 = vmatpush1.msra.mxu0 0.0
  %967 = vmatprep.subr.mxu0 0.0
  %968 = vmatpush1.msra.mxu0 0.0
  %969 = vmatprep.subr.mxu0 0.0
  %970 = vmatpush1.msra.mxu0 0.0
  %971 = vmatprep.subr.mxu0 0.0
  %972 = vmatpush1.msra.mxu0 0.0
  %973 = vmatprep.subr.mxu0 0.0
  %974 = vmatpush1.msra.mxu0 0.0
  %975 = vmatprep.subr.mxu0 0.0
  %976 = vmatpush1.msra.mxu0 0.0
  %977 = vmatprep.subr.mxu0 0.0
  %978 = vmatpush1.msra.mxu0 0.0
  %979 = vmatprep.subr.mxu0 0.0
  %980 = vmatpush1.msra.mxu0 0.0
  %981 = vmatprep.subr.mxu0 0.0
  %982 = vmatpush1.msra.mxu0 0.0
  %983 = vmatprep.subr.mxu0 0.0
  %984 = vmatpush1.msra.mxu0 0.0
  %985 = vmatprep.subr.mxu0 0.0
  %986 = vmatpush1.msra.mxu0 0.0
  %987 = vmatprep.subr.mxu0 0.0
  %988 = vmatpush1.msra.mxu0 0.0
  %989 = vmatprep.subr.mxu0 0.0
  %990 = vmatpush1.msra.mxu0 0.0
  %991 = vmatprep.subr.mxu0 0.0
  %992 = vmatpush1.msra.mxu0 0.0
  %993 = vmatprep.subr.mxu0 0.0
  %994 = vmatpush1.msra.mxu0 0.0
  %995 = vmatprep.subr.mxu0 0.0
  %996 = vmatpush1.msra.mxu0 0.0
  %997 = vmatprep.subr.mxu0 0.0
  %998 = vmatpush1.msra.mxu0 0.0
  %999 = vmatprep.subr.mxu0 0.0
  %1000 = vmatpush1.msra.mxu0 0.0
  %1001 = vmatprep.subr.mxu0 0.0
  %1002 = vmatpush1.msra.mxu0 0.0
  %1003 = vmatprep.subr.mxu0 0.0
  %1004 = vmatpush1.msra.mxu0 0.0
  %1005 = vmatprep.subr.mxu0 0.0
  %1006 = vmatpush1.msra.mxu0 0.0
  %1007 = vmatprep.subr.mxu0 0.0
  %1008 = vmatpush1.msra.mxu0 0.0
  %1009 = vmatprep.subr.mxu0 0.0
  %1010 = vmatpush1.msra.mxu0 0.0
  %1011 = vmatprep.mubr.f32.mxu0 0.0
  %1012 = vmatmul.mubr.f32.gmra.mrb[0].mxu0 %v945
  %v1013 = vpop.f32.mrb[0].mxu0
  %v1014 = vadd.f32 0.0, %v1013
  %v1015 = vpop.f32.mrb[0].mxu0
  %v1016 = vadd.f32 0.0, %v1015
  %1017 = vdwg.mxu0
  %s1018 = scalar_lea.vmem %s1, 48
  %v1019 = vld [vmem:[%s1018] sm:$0xff]
  %s1020 = scalar_lea.vmem %s36, 8
  %v1021 = vld [vmem:[%s1020] sm:$0xff]
  %v1022 = vadd.f32 %v1019, %v1014
  %v1023 = vadd.f32 %v1021, %v1016
  %v1024 = vtanh.pop %v1022
  %v1025 = vtanh.pop %v1023
  %v1026 = vmul.f32 %v1024, 0.5
  %v1027 = vadd.f32 %v1026, 0.5
  %v1028 = vld [vmem:[#allocation3] sm:$0xff]
  %1030 = vrot.lane.b32.xlu0 %v1028, 32
  %v1031 = vpop.permute.xlu0 %1030
  %v1033 = vmul.f32 %v1027, %v1031
  %1035 = vrot.lane.b32.xlu0 %v1024, 32
  %v1036 = vpop.permute.xlu0 %1035
  %v1038 = vmul.f32 %v1027, %v1036
  %1040 = vrot.lane.b32.xlu0 %v1038, 32
  %v1041 = vpop.permute.xlu0 %1040
  %v1043 = vadd.f32 %v1033, %v1041
  %v1044 = vmul.f32 %v1025, 0.5
  %v1045 = vadd.f32 %v1044, 0.5
  %v1046 = vmul.f32 %v1045, %v1028
  %1048 = vrot.lane.b32.xlu0 %v1025, 32
  %v1049 = vpop.permute.xlu0 %1048
  %v1051 = vmul.f32 %v1045, %v1049
  %1053 = vrot.lane.b32.xlu0 %v1051, 32
  %v1054 = vpop.permute.xlu0 %1053
  %v1056 = vadd.f32 %v1046, %v1054
  %1058 = vrot.lane.b32.xlu0 %v1043, 96
  %v1059 = vpop.permute.xlu0 %1058
  %v1061 = vsel %vm186, %v1059, %v1056
  %1063 = vrot.lane.b32.xlu0 %v1027, 64
  %v1064 = vpop.permute.xlu0 %1063
  %1067 = vrot.lane.b32.xlu0 %v1045, 96
  %v1068 = vpop.permute.xlu0 %1067
  %v1070 = vsel %vm186, %v1064, %v1068
  %v1071 = vtanh.pop %v1061
  %v1072 = vmul.f32 %v1070, %v1071
  %v1073 = vstv %s941
  %v1074 = vstv %s942
  %v1075 = vsel %vm65, %v1073, %v1074
  %vm1076 = vcmp.gt.s32.totalorder %v204, %v1075
  %v1077 = vsel %vm1076, %v1061, %v1028
  %1078 = vst.msk [vmem:[#allocation3] sm:$0xff] %vm69, %v1077
  %v1079 = vld [vmem:[#allocation2] sm:$0xff]
  %v1080 = vsel %vm1076, %v1072, %v1079
  %1081 = vst.msk [vmem:[#allocation2] sm:$0xff] %vm69, %v1080
  %v1082 = vsel %vm1076, %v1072, 0.0
  %1083 = vst.msk [vmem:[%s4 + $0x18] sm:$0xff] %vm69, %v1082
  %s1084 = sadd.s32 %s66, 7
  %s1085 = ssub.s32 0, %s66
  %v1086 = vld [vmem:[#allocation2] sm:$0xff]
  %v1088 = vsel %vm69, %v1086, 0
  %1090 = vmatprep.subr.mxu0 %v47
  %1091 = vmatpush1.msra.mxu0 %v46
  %1092 = vmatprep.subr.mxu0 %v49
  %1093 = vmatpush1.msra.mxu0 %v48
  %1094 = vmatprep.subr.mxu0 %v51
  %1095 = vmatpush1.msra.mxu0 %v50
  %1096 = vmatprep.subr.mxu0 %v53
  %1097 = vmatpush1.msra.mxu0 %v52
  %1098 = vmatprep.subr.mxu0 %v55
  %1099 = vmatpush1.msra.mxu0 %v54
  %1100 = vmatprep.subr.mxu0 %v57
  %1101 = vmatpush1.msra.mxu0 %v56
  %1102 = vmatprep.subr.mxu0 %v59
  %1103 = vmatpush1.msra.mxu0 %v58
  %1104 = vmatprep.subr.mxu0 %v61
  %1105 = vmatpush1.msra.mxu0 %v60
  %1106 = vmatprep.subr.mxu0 0.0
  %1107 = vmatpush1.msra.mxu0 0.0
  %1108 = vmatprep.subr.mxu0 0.0
  %1109 = vmatpush1.msra.mxu0 0.0
  %1110 = vmatprep.subr.mxu0 0.0
  %1111 = vmatpush1.msra.mxu0 0.0
  %1112 = vmatprep.subr.mxu0 0.0
  %1113 = vmatpush1.msra.mxu0 0.0
  %1114 = vmatprep.subr.mxu0 0.0
  %1115 = vmatpush1.msra.mxu0 0.0
  %1116 = vmatprep.subr.mxu0 0.0
  %1117 = vmatpush1.msra.mxu0 0.0
  %1118 = vmatprep.subr.mxu0 0.0
  %1119 = vmatpush1.msra.mxu0 0.0
  %1120 = vmatprep.subr.mxu0 0.0
  %1121 = vmatpush1.msra.mxu0 0.0
  %1122 = vmatprep.subr.mxu0 0.0
  %1123 = vmatpush1.msra.mxu0 0.0
  %1124 = vmatprep.subr.mxu0 0.0
  %1125 = vmatpush1.msra.mxu0 0.0
  %1126 = vmatprep.subr.mxu0 0.0
  %1127 = vmatpush1.msra.mxu0 0.0
  %1128 = vmatprep.subr.mxu0 0.0
  %1129 = vmatpush1.msra.mxu0 0.0
  %1130 = vmatprep.subr.mxu0 0.0
  %1131 = vmatpush1.msra.mxu0 0.0
  %1132 = vmatprep.subr.mxu0 0.0
  %1133 = vmatpush1.msra.mxu0 0.0
  %1134 = vmatprep.subr.mxu0 0.0
  %1135 = vmatpush1.msra.mxu0 0.0
  %1136 = vmatprep.subr.mxu0 0.0
  %1137 = vmatpush1.msra.mxu0 0.0
  %1138 = vmatprep.subr.mxu0 0.0
  %1139 = vmatpush1.msra.mxu0 0.0
  %1140 = vmatprep.subr.mxu0 0.0
  %1141 = vmatpush1.msra.mxu0 0.0
  %1142 = vmatprep.subr.mxu0 0.0
  %1143 = vmatpush1.msra.mxu0 0.0
  %1144 = vmatprep.subr.mxu0 0.0
  %1145 = vmatpush1.msra.mxu0 0.0
  %1146 = vmatprep.subr.mxu0 0.0
  %1147 = vmatpush1.msra.mxu0 0.0
  %1148 = vmatprep.subr.mxu0 0.0
  %1149 = vmatpush1.msra.mxu0 0.0
  %1150 = vmatprep.subr.mxu0 0.0
  %1151 = vmatpush1.msra.mxu0 0.0
  %1152 = vmatprep.subr.mxu0 0.0
  %1153 = vmatpush1.msra.mxu0 0.0
  %1154 = vmatprep.mubr.f32.mxu0 0.0
  %1155 = vmatmul.mubr.f32.gmra.mrb[0].mxu0 %v1088
  %v1156 = vpop.f32.mrb[0].mxu0
  %v1157 = vadd.f32 0.0, %v1156
  %v1158 = vpop.f32.mrb[0].mxu0
  %v1159 = vadd.f32 0.0, %v1158
  %1160 = vdwg.mxu0
  %s1161 = scalar_lea.vmem %s1, 56
  %v1162 = vld [vmem:[%s1161] sm:$0xff]
  %v1163 = vld [vmem:[%s36] sm:$0xff]
  %v1164 = vadd.f32 %v1162, %v1157
  %v1165 = vadd.f32 %v1163, %v1159
  %v1166 = vtanh.pop %v1164
  %v1167 = vtanh.pop %v1165
  %v1168 = vmul.f32 %v1166, 0.5
  %v1169 = vadd.f32 %v1168, 0.5
  %v1170 = vld [vmem:[#allocation3] sm:$0xff]
  %1172 = vrot.lane.b32.xlu0 %v1170, 32
  %v1173 = vpop.permute.xlu0 %1172
  %v1175 = vmul.f32 %v1169, %v1173
  %1177 = vrot.lane.b32.xlu0 %v1166, 32
  %v1178 = vpop.permute.xlu0 %1177
  %v1180 = vmul.f32 %v1169, %v1178
  %1182 = vrot.lane.b32.xlu0 %v1180, 32
  %v1183 = vpop.permute.xlu0 %1182
  %v1185 = vadd.f32 %v1175, %v1183
  %v1186 = vmul.f32 %v1167, 0.5
  %v1187 = vadd.f32 %v1186, 0.5
  %v1188 = vmul.f32 %v1187, %v1170
  %1190 = vrot.lane.b32.xlu0 %v1167, 32
  %v1191 = vpop.permute.xlu0 %1190
  %v1193 = vmul.f32 %v1187, %v1191
  %1195 = vrot.lane.b32.xlu0 %v1193, 32
  %v1196 = vpop.permute.xlu0 %1195
  %v1198 = vadd.f32 %v1188, %v1196
  %1200 = vrot.lane.b32.xlu0 %v1185, 96
  %v1201 = vpop.permute.xlu0 %1200
  %v1203 = vsel %vm186, %v1201, %v1198
  %1205 = vrot.lane.b32.xlu0 %v1169, 64
  %v1206 = vpop.permute.xlu0 %1205
  %1209 = vrot.lane.b32.xlu0 %v1187, 96
  %v1210 = vpop.permute.xlu0 %1209
  %v1212 = vsel %vm186, %v1206, %v1210
  %v1213 = vtanh.pop %v1203
  %v1214 = vmul.f32 %v1212, %v1213
  %v1215 = vstv %s1084
  %v1216 = vstv %s1085
  %v1217 = vsel %vm65, %v1215, %v1216
  %vm1218 = vcmp.gt.s32.totalorder %v204, %v1217
  %v1219 = vsel %vm1218, %v1203, %v1170
  %1220 = vst.msk [vmem:[#allocation3] sm:$0xff] %vm69, %v1219
  %v1221 = vld [vmem:[#allocation2] sm:$0xff]
  %v1222 = vsel %vm1218, %v1214, %v1221
  %1223 = vst.msk [vmem:[#allocation2] sm:$0xff] %vm69, %v1222
  %v1224 = vsel %vm1218, %v1214, 0.0
  %1226 = vrot.lane.b32.xlu0 %v1224, 64
  %v1227 = vpop.permute.xlu0 %1226
  %1229 = vst.msk [vmem:[%s4 + $0x18] sm:$0xff] %vm359, %v1227
  // Predicated region
  $region22: #{encoder_forward.1} parent=0 // pred_check
    _
  $region23: #{encoder_forward.1} parent=0 // pred_check_branch
    %1231 = sbr.rel (0) target = $region25
  $region24: #{encoder_forward.1} parent=0 // pred_region
    _
  $region25: #{encoder_forward.1} parent=0 // pred_fallthru
    _
  // Predicated region
  $region26: #{encoder_forward.1} parent=0 // pred_check
    _
  $region27: #{encoder_forward.1} parent=0 // pred_check_branch
    %1233 = sbr.rel (0) target = $region29
  $region28: #{encoder_forward.1} parent=0 // pred_region
    _
  $region29: #{encoder_forward.1} parent=0 // pred_fallthru
    _

</llo_original>
